<compile_context>
chip_gen: v6e
topology: v6e:2x2x1
jax: 0.10.0
libtpu: 0.0.40
codegen_flags: <defaults>
</compile_context>

<pallas_src>
import jax
import jax.numpy as jnp
from jax.experimental import pallas as pl
from jax.experimental.pallas import tpu as pltpu


# ---------------------------------------------------------------------------
# Kernels
# ---------------------------------------------------------------------------

def gtconv_kernel(w_sm, a_ref, out_ref):
    """out[o] = sum_c w_sm[o, c] * A[c] for every output channel o.

    w_sm    : (O, C) softmaxed conv weights in SMEM (scalar prefetch)
    a_ref   : (C, tc, tc) bf16 tile of the adjacency stack A
    out_ref : (O, tc, tc) bf16 tile of the conv result (all O channels per
              pass, so A is read from HBM exactly once for this conv)
    """
    num_o = out_ref.shape[0]
    num_c = a_ref.shape[0]
    a = a_ref[...].astype(jnp.float32)          # upcast once, reuse for all o
    for o in range(num_o):                      # O, C are tiny & static
        acc = w_sm[o, 0] * a[0]
        for c in range(1, num_c):
            acc = acc + w_sm[o, c] * a[c]
        out_ref[o, :, :] = acc.astype(out_ref.dtype)


def bmm_kernel(lhs_ref, rhs_ref, out_ref, acc_ref):
    """Batched tiled matmul: H[o] += lhs[o]_tile @ rhs[o]_tile along K axis.

    lhs_ref : (1, tm, tk) bf16 tile
    rhs_ref : (1, tk, tn) bf16 tile
    out_ref : (1, tm, tn) f32 output tile
    acc_ref : (tm, tn) f32 accumulator, resident across the K grid axis
    """
    k = pl.program_id(3)

    @pl.when(k == 0)
    def _init():
        acc_ref[...] = jnp.zeros_like(acc_ref)

    acc_ref[...] += jnp.dot(
        lhs_ref[0], rhs_ref[0], preferred_element_type=jnp.float32)

    @pl.when(k == pl.num_programs(3) - 1)
    def _finalize():
        out_ref[0, :, :] = acc_ref[...].astype(out_ref.dtype)


# ---------------------------------------------------------------------------
# Wrapper helpers
# ---------------------------------------------------------------------------

def _round_up(x, m):
    return (x + m - 1) // m * m


def _softmax_rows(w2d):
    m = jnp.max(w2d, axis=1, keepdims=True)
    e = jnp.exp(w2d - m)
    return e / jnp.sum(e, axis=1, keepdims=True)


def _vmem_limit_bytes():
    """Generation-aware scoped VMEM limit (v5e/v6e: 128 MiB phys, v7x: 64 MiB)."""
    try:
        cap = int(pltpu.get_tpu_info().vmem_capacity_bytes)
    except Exception:
        cap = 64 * 1024 * 1024                  # conservative (v7x-sized) fallback
    return min((cap * 3) // 4, 100 * 1024 * 1024)   # ~48 MiB on v7x, ~96 MiB on v5e/v6e


def _pick_bmm_tile(n_pad, budget_bytes):
    """Largest square tile whose double-buffered bf16 working set fits VMEM."""
    for t in (1024, 512, 256, 128):
        if n_pad % t:
            continue
        working = (
            2 * (t * t) * 2 * 2      # lhs bf16 tile, double-buffered
            + 2 * (t * t) * 2 * 2    # rhs bf16 tile, double-buffered
            + 2 * (t * t) * 4        # f32 output tile, double-buffered
            + (t * t) * 4            # f32 accumulator scratch
        )
        if working <= budget_bytes:
            return t
    return 128


# ---------------------------------------------------------------------------
# Pallas stages
# ---------------------------------------------------------------------------

def _gtconv(a_pad_bf16, w_sm, tile, vmem_limit):
    """Precompute conv(A) = sum_c softmax(W)[:, c] * A[c] as (O, n_pad, n_pad) bf16."""
    C, n_pad, _ = a_pad_bf16.shape
    O = w_sm.shape[0]
    tc = 512 if (tile >= 512 and n_pad % 512 == 0) else 256
    if n_pad % tc:
        tc = 128
    g = n_pad // tc

    cost = pl.CostEstimate(
        flops=2 * O * C * n_pad * n_pad,
        transcendentals=0,
        bytes_accessed=(C + O) * n_pad * n_pad * 2,      # bf16 in + bf16 out, single pass
    )
    return pl.pallas_call(
        gtconv_kernel,
        out_shape=jax.ShapeDtypeStruct((O, n_pad, n_pad), jnp.bfloat16),
        grid_spec=pltpu.PrefetchScalarGridSpec(
            num_scalar_prefetch=1,
            grid=(g, g),
            in_specs=[pl.BlockSpec((C, tc, tc), lambda i, j, w: (0, i, j))],
            out_specs=pl.BlockSpec((O, tc, tc), lambda i, j, w: (0, i, j)),
        ),
        compiler_params=pltpu.CompilerParams(
            dimension_semantics=("parallel", "parallel"),
            vmem_limit_bytes=vmem_limit,
        ),
        cost_estimate=cost,
    )(w_sm, a_pad_bf16)


def _batched_matmul(lhs_bf16, rhs_bf16, tile, vmem_limit):
    """H[o] = lhs[o] @ rhs[o], bf16 MXU inputs, f32 accumulation/output."""
    O, n_pad, _ = lhs_bf16.shape
    t = tile
    g = n_pad // t

    cost = pl.CostEstimate(
        flops=2 * O * n_pad ** 3,
        transcendentals=0,
        # lhs read g (=gn) times, rhs read g (=gm) times (bf16), out written once (f32)
        bytes_accessed=2 * O * n_pad * n_pad * 2 * g + O * n_pad * n_pad * 4,
    )
    return pl.pallas_call(
        bmm_kernel,
        out_shape=jax.ShapeDtypeStruct((O, n_pad, n_pad), jnp.float32),
        grid_spec=pltpu.PrefetchScalarGridSpec(
            num_scalar_prefetch=0,
            grid=(O, g, g, g),
            in_specs=[
                pl.BlockSpec((1, t, t), lambda o, i, j, k: (o, i, k)),
                pl.BlockSpec((1, t, t), lambda o, i, j, k: (o, k, j)),
            ],
            out_specs=pl.BlockSpec((1, t, t), lambda o, i, j, k: (o, i, j)),
            scratch_shapes=[pltpu.VMEM((t, t), jnp.float32)],
        ),
        compiler_params=pltpu.CompilerParams(
            dimension_semantics=("parallel", "parallel", "parallel", "arbitrary"),
            vmem_limit_bytes=vmem_limit,
        ),
        cost_estimate=cost,
    )(lhs_bf16, rhs_bf16)


# ---------------------------------------------------------------------------
# GTLayer forward
# ---------------------------------------------------------------------------

def gt_layer(A, weights, H_prev=None, first=True):
    """Pallas TPU forward of GTLayer.

    A: (C, N, N) adjacency stack. weights: list of (O, C, 1, 1) conv weights.
    H_prev: (O, N, N) when first=False.
    Returns (H, W): H is (O, N, N) f32; W mirrors [F.softmax(w, dim=1), ...].
    """
    C, N, _ = A.shape
    # 256-aligned padding: lane-dense stores + full 256x256 MXU pushes (v6e/v7x).
    n_pad = _round_up(max(N, 256), 256)
    vmem_limit = _vmem_limit_bytes()
    tile = _pick_bmm_tile(n_pad, int(vmem_limit * 0.7))   # ~30% headroom for copies

    pad = ((0, 0), (0, n_pad - N), (0, n_pad - N))
    A_bf16 = A.astype(jnp.bfloat16)                        # stream bf16, not f32
    A_pad = jnp.pad(A_bf16, pad) if n_pad != N else A_bf16

    if first:
        w1, w2 = weights
        O = w1.shape[0]
        w1s = _softmax_rows(w1.reshape(O, C).astype(jnp.float32))
        w2s = _softmax_rows(w2.reshape(O, C).astype(jnp.float32))

        conv1 = _gtconv(A_pad, w1s, tile, vmem_limit)      # (O, n_pad, n_pad) bf16
        conv2 = _gtconv(A_pad, w2s, tile, vmem_limit)
        h_pad = _batched_matmul(conv1, conv2, tile, vmem_limit)

        # .detach().cpu() in the reference is host-side glue; values identical.
        W = [w1s.reshape(O, C, 1, 1), w2s.reshape(O, C, 1, 1)]
    else:
        (w1,) = weights
        O = w1.shape[0]
        w1s = _softmax_rows(w1.reshape(O, C).astype(jnp.float32))

        conv1 = _gtconv(A_pad, w1s, tile, vmem_limit)
        hp = H_prev.astype(jnp.bfloat16)
        hp_pad = jnp.pad(hp, pad) if n_pad != N else hp
        h_pad = _batched_matmul(hp_pad, conv1, tile, vmem_limit)

        W = [w1s.reshape(O, C, 1, 1)]

    H = h_pad[:, :N, :N] if n_pad != N else h_pad
    return H, W


# ---------------------------------------------------------------------------
# Pure-JAX reference (f32) and self-test
# ---------------------------------------------------------------------------

def _reference(A, weights, H_prev=None, first=True):
    prec = jax.lax.Precision.HIGHEST
    if first:
        w1, w2 = weights
        ws1 = jax.nn.softmax(w1, axis=1)
        ws2 = jax.nn.softmax(w2, axis=1)
        a = jnp.sum(A * ws1, axis=1)   # (C,N,N)*(O,C,1,1) -> (O,C,N,N) -> (O,N,N)
        b = jnp.sum(A * ws2, axis=1)
        return jnp.matmul(a, b, precision=prec), [ws1, ws2]
    else:
        (w1,) = weights
        ws1 = jax.nn.softmax(w1, axis=1)
        a = jnp.sum(A * ws1, axis=1)
        return jnp.matmul(H_prev, a, precision=prec), [ws1]


if __name__ == "__main__":
    key = jax.random.PRNGKey(0)
    kA, k1, k2 = jax.random.split(key, 3)

    in_channels, out_channels, N = 4, 2, 16
    # Adjacency-style input (C, N, N); deterministic synthetic values.
    A = jax.random.uniform(kA, (in_channels, N, N), dtype=jnp.float32)
    # Reference init is constant 0.1 (softmax -> uniform); use random weights
    # so the softmax / weighted sum is non-trivial.
    W1 = 0.1 * jax.random.normal(k1, (out_channels, in_channels, 1, 1), dtype=jnp.float32)
    W2 = 0.1 * jax.random.normal(k2, (out_channels, in_channels, 1, 1), dtype=jnp.float32)

    # --- first=True branch: H = bmm(conv1(A), conv2(A)) ---
    H, Wsm = gt_layer(A, [W1, W2], first=True)
    H = jax.block_until_ready(H)
    H_ref, Wsm_ref = _reference(A, [W1, W2], first=True)
    # bf16 streamed inputs / bf16 MXU operands, f32 accumulation -> loosened tolerance.
    assert jnp.allclose(H, H_ref, rtol=2e-2, atol=1e-2), float(jnp.max(jnp.abs(H - H_ref)))
    assert jnp.allclose(Wsm[0], Wsm_ref[0], atol=1e-6)
    assert jnp.allclose(Wsm[1], Wsm_ref[1], atol=1e-6)

    # --- first=False branch: H2 = bmm(H_prev, conv1(A)) ---
    H2, Wsm2 = gt_layer(A, [W1], H_prev=H, first=False)
    H2 = jax.block_until_ready(H2)
    H2_ref, Wsm2_ref = _reference(A, [W1], H_prev=H, first=False)
    assert jnp.allclose(H2, H2_ref, rtol=2e-2, atol=1e-2), float(jnp.max(jnp.abs(H2 - H2_ref)))
    assert jnp.allclose(Wsm2[0], Wsm2_ref[0], atol=1e-6)

    print("KERNEL_OK")
</pallas_src>

<mosaic_0001>
module attributes {stable_mosaic.version = 11 : i64} {
  func.func @gtconv_kernel(%arg0: i32, %arg1: i32, %arg2: memref<2x4xf32, #tpu.memory_space<smem>>, %arg3: memref<4x256x256xbf16, #tpu.memory_space<vmem>>, %arg4: memref<2x256x256xbf16, #tpu.memory_space<vmem>>) attributes {dimension_semantics = [#tpu.dimension_semantics<parallel>, #tpu.dimension_semantics<parallel>], iteration_bounds = array<i64: 1, 1>, scalar_prefetch = 1 : i64, scratch_operands = 0 : i64, tpu.core_type = #tpu.core_type<tc>, window_params = [{transform_indices = @transform_0, window_bounds = array<i64: 4, 256, 256>}, {transform_indices = @transform_1, window_bounds = array<i64: 2, 256, 256>}]} {
    %c0 = arith.constant 0 : index
    %c0_0 = arith.constant 0 : index
    %c0_1 = arith.constant 0 : index
    %0 = vector.load %arg3[%c0, %c0_0, %c0_1] : memref<4x256x256xbf16, #tpu.memory_space<vmem>>, vector<4x256x256xbf16>
    %1 = arith.extf %0 : vector<4x256x256xbf16> to vector<4x256x256xf32>
    %c0_2 = arith.constant 0 : index
    %c0_3 = arith.constant 0 : index
    %2 = memref.load %arg2[%c0_2, %c0_3] : memref<2x4xf32, #tpu.memory_space<smem>>
    %3 = vector.extract_strided_slice %1 {offsets = [0, 0, 0], sizes = [1, 256, 256], strides = [1, 1, 1]} : vector<4x256x256xf32> to vector<1x256x256xf32>
    %4 = vector.shape_cast %3 : vector<1x256x256xf32> to vector<256x256xf32>
    %5 = vector.broadcast %2 : f32 to vector<256x256xf32>
    %6 = arith.mulf %5, %4 : vector<256x256xf32>
    %c0_4 = arith.constant 0 : index
    %c1 = arith.constant 1 : index
    %7 = memref.load %arg2[%c0_4, %c1] : memref<2x4xf32, #tpu.memory_space<smem>>
    %8 = vector.extract_strided_slice %1 {offsets = [1, 0, 0], sizes = [1, 256, 256], strides = [1, 1, 1]} : vector<4x256x256xf32> to vector<1x256x256xf32>
    %9 = vector.shape_cast %8 : vector<1x256x256xf32> to vector<256x256xf32>
    %10 = vector.broadcast %7 : f32 to vector<256x256xf32>
    %11 = arith.mulf %10, %9 : vector<256x256xf32>
    %12 = arith.addf %6, %11 : vector<256x256xf32>
    %c0_5 = arith.constant 0 : index
    %c2 = arith.constant 2 : index
    %13 = memref.load %arg2[%c0_5, %c2] : memref<2x4xf32, #tpu.memory_space<smem>>
    %14 = vector.extract_strided_slice %1 {offsets = [2, 0, 0], sizes = [1, 256, 256], strides = [1, 1, 1]} : vector<4x256x256xf32> to vector<1x256x256xf32>
    %15 = vector.shape_cast %14 : vector<1x256x256xf32> to vector<256x256xf32>
    %16 = vector.broadcast %13 : f32 to vector<256x256xf32>
    %17 = arith.mulf %16, %15 : vector<256x256xf32>
    %18 = arith.addf %12, %17 : vector<256x256xf32>
    %c0_6 = arith.constant 0 : index
    %c3 = arith.constant 3 : index
    %19 = memref.load %arg2[%c0_6, %c3] : memref<2x4xf32, #tpu.memory_space<smem>>
    %20 = vector.extract_strided_slice %1 {offsets = [3, 0, 0], sizes = [1, 256, 256], strides = [1, 1, 1]} : vector<4x256x256xf32> to vector<1x256x256xf32>
    %21 = vector.shape_cast %20 : vector<1x256x256xf32> to vector<256x256xf32>
    %22 = vector.broadcast %19 : f32 to vector<256x256xf32>
    %23 = arith.mulf %22, %21 : vector<256x256xf32>
    %24 = arith.addf %18, %23 : vector<256x256xf32>
    %25 = arith.truncf %24 : vector<256x256xf32> to vector<256x256xbf16>
    %c0_7 = arith.constant 0 : index
    %c0_8 = arith.constant 0 : index
    %c0_9 = arith.constant 0 : index
    %26 = vector.load %arg4[%c0_7, %c0_8, %c0_9] : memref<2x256x256xbf16, #tpu.memory_space<vmem>>, vector<1x256x256xbf16>
    %27 = vector.shape_cast %26 : vector<1x256x256xbf16> to vector<256x256xbf16>
    %28 = vector.shape_cast %25 : vector<256x256xbf16> to vector<1x256x256xbf16>
    tpu.vector_store %arg4[%c0_7, %c0_8, %c0_9], %28 {strides = array<i32>} : memref<2x256x256xbf16, #tpu.memory_space<vmem>>, vector<1x256x256xbf16>,
    %c1_10 = arith.constant 1 : index
    %c0_11 = arith.constant 0 : index
    %29 = memref.load %arg2[%c1_10, %c0_11] : memref<2x4xf32, #tpu.memory_space<smem>>
    %30 = vector.extract_strided_slice %1 {offsets = [0, 0, 0], sizes = [1, 256, 256], strides = [1, 1, 1]} : vector<4x256x256xf32> to vector<1x256x256xf32>
    %31 = vector.shape_cast %30 : vector<1x256x256xf32> to vector<256x256xf32>
    %32 = vector.broadcast %29 : f32 to vector<256x256xf32>
    %33 = arith.mulf %32, %31 : vector<256x256xf32>
    %c1_12 = arith.constant 1 : index
    %c1_13 = arith.constant 1 : index
    %34 = memref.load %arg2[%c1_12, %c1_13] : memref<2x4xf32, #tpu.memory_space<smem>>
    %35 = vector.extract_strided_slice %1 {offsets = [1, 0, 0], sizes = [1, 256, 256], strides = [1, 1, 1]} : vector<4x256x256xf32> to vector<1x256x256xf32>
    %36 = vector.shape_cast %35 : vector<1x256x256xf32> to vector<256x256xf32>
    %37 = vector.broadcast %34 : f32 to vector<256x256xf32>
    %38 = arith.mulf %37, %36 : vector<256x256xf32>
    %39 = arith.addf %33, %38 : vector<256x256xf32>
    %c1_14 = arith.constant 1 : index
    %c2_15 = arith.constant 2 : index
    %40 = memref.load %arg2[%c1_14, %c2_15] : memref<2x4xf32, #tpu.memory_space<smem>>
    %41 = vector.extract_strided_slice %1 {offsets = [2, 0, 0], sizes = [1, 256, 256], strides = [1, 1, 1]} : vector<4x256x256xf32> to vector<1x256x256xf32>
    %42 = vector.shape_cast %41 : vector<1x256x256xf32> to vector<256x256xf32>
    %43 = vector.broadcast %40 : f32 to vector<256x256xf32>
    %44 = arith.mulf %43, %42 : vector<256x256xf32>
    %45 = arith.addf %39, %44 : vector<256x256xf32>
    %c1_16 = arith.constant 1 : index
    %c3_17 = arith.constant 3 : index
    %46 = memref.load %arg2[%c1_16, %c3_17] : memref<2x4xf32, #tpu.memory_space<smem>>
    %47 = vector.extract_strided_slice %1 {offsets = [3, 0, 0], sizes = [1, 256, 256], strides = [1, 1, 1]} : vector<4x256x256xf32> to vector<1x256x256xf32>
    %48 = vector.shape_cast %47 : vector<1x256x256xf32> to vector<256x256xf32>
    %49 = vector.broadcast %46 : f32 to vector<256x256xf32>
    %50 = arith.mulf %49, %48 : vector<256x256xf32>
    %51 = arith.addf %45, %50 : vector<256x256xf32>
    %52 = arith.truncf %51 : vector<256x256xf32> to vector<256x256xbf16>
    %c1_18 = arith.constant 1 : index
    %c0_19 = arith.constant 0 : index
    %c0_20 = arith.constant 0 : index
    %53 = vector.load %arg4[%c1_18, %c0_19, %c0_20] : memref<2x256x256xbf16, #tpu.memory_space<vmem>>, vector<1x256x256xbf16>
    %54 = vector.shape_cast %53 : vector<1x256x256xbf16> to vector<256x256xbf16>
    %55 = vector.shape_cast %52 : vector<256x256xbf16> to vector<1x256x256xbf16>
    tpu.vector_store %arg4[%c1_18, %c0_19, %c0_20], %55 {strides = array<i32>} : memref<2x256x256xbf16, #tpu.memory_space<vmem>>, vector<1x256x256xbf16>,
    return
  }
  func.func @transform_0(%arg0: i32, %arg1: i32, %arg2: memref<2x4xf32, #tpu.memory_space<smem>>) -> (i32, i32, i32) {
    %c0_i32 = arith.constant 0 : i32
    %c0_i32_0 = arith.constant 0 : i32
    return %c0_i32, %arg0, %arg1 : i32, i32, i32
  }
  func.func @transform_1(%arg0: i32, %arg1: i32, %arg2: memref<2x4xf32, #tpu.memory_space<smem>>) -> (i32, i32, i32) {
    %c0_i32 = arith.constant 0 : i32
    %c0_i32_0 = arith.constant 0 : i32
    return %c0_i32, %arg0, %arg1 : i32, i32, i32
  }
}

</mosaic_0001>

<llo_original>
// kernel: tpu_custom_call.1
$region0: #{tpu_custom_call.1}
  #allocation0 [shape = 'u32[]', space=smem, size = 0x4, offset = 0x4, fixed_abs, tag = 'smem constant byte address 0x4 - core index']
  #allocation1 [shape = 'u32[144,128]{1,0:T(1,128)}', space=vmem, size = 0x12000, scoped, tag = 'internal scratch']
  #allocation2 [shape = 's32[1]{0}', space=sflag, size = 0x4, scoped, tag = 'scoped memory for tpu_custom_call.1']
  #allocation3 [shape = 'u8[1024]{0}', space=smem, size = 0x400, scoped, tag = 'prefetched SMEM operand 0']
  %s0 = inlined_call_operand.hbm [shape: f32[2,4], index: 0, kind: input, shape index: {}]
  %s1 = inlined_call_operand.hbm [shape: bf16[4,256,256], index: 1, kind: input, shape index: {}]
  %s2 = inlined_call_operand.hbm [shape: bf16[2,256,256], index: 2, kind: output, shape index: {}]
  %s3 = sld [smem:[#allocation0]]
  $region18: #{tpu_custom_call.1} parent=0
    _
  %s5 = ssub.s32 1, %s3
  %s6 = scalar_select 0, %s5, %s3
  %8 = dma.hbm_to_smem %s0, 32, [#allocation3], [#allocation2]
  %9 = dma.done [#allocation2], 32
  %10 = sfence
  $region1: #{tpu_custom_call.1} parent=0
    #allocation4 [shape = 'u8[524288]{0}', space=vmem, size = 0x80000, scoped, tag = 'input window, operand 1, single buffered']
    #allocation5 [shape = 's32[1]{0}', space=sflag, size = 0x4, scoped, tag = 'scoped memory for tpu_custom_call.1']
    #allocation6 [shape = 's32[1]{0}', space=sflag, size = 0x4, scoped, tag = 'scoped memory for tpu_custom_call.1']
    #allocation7 [shape = 'u8[262144]{0}', space=vmem, size = 0x40000, scoped, tag = 'output window, operand 0, single buffered']
    %11 = vsyncpa [#allocation5], 0
    %12 = vsyncpa [#allocation6], 0
    // Predicated region
    $region2: #{tpu_custom_call.1} parent=1 // pred_check
      _
    $region3: #{tpu_custom_call.1} parent=1 // pred_check_branch
      %14 = sbr.rel (0) target = $region5
    $region4: #{tpu_custom_call.1} parent=1 // pred_region
      %s16 = ssub.s32 16384, 16384
      %17 = vsyncadd [#allocation5], %s16
      %s18 = sshll.u32 [#allocation4], 4
      %s19 = int_to_ptr.vmem [resolvable:$true] %s18
      %24 = dma.hbm_to_vmem [thread:$0]  %s1, 16384, %s19, [#allocation5], 128, 128, 8
    $region5: #{tpu_custom_call.1} parent=1 // pred_fallthru
      _
    // Predicated region
    $region6: #{tpu_custom_call.1} parent=1 // pred_check
      _
    $region7: #{tpu_custom_call.1} parent=1 // pred_check_branch
      %26 = sbr.rel (0) target = $region9
    $region8: #{tpu_custom_call.1} parent=1 // pred_region
      %27 = dma.done [#allocation5], 16384
    $region9: #{tpu_custom_call.1} parent=1 // pred_fallthru
      _
    %v28 = vld [vmem:[#allocation4] sm:$0xff]
    %v29 = vld [vmem:[#allocation4 + $0x8] sm:$0xff]
    %v30 = vld [vmem:[#allocation4 + $0x10] sm:$0xff]
    %v31 = vld [vmem:[#allocation4 + $0x18] sm:$0xff]
    %v32 = vld [vmem:[#allocation4 + $0x20] sm:$0xff]
    %v33 = vld [vmem:[#allocation4 + $0x28] sm:$0xff]
    %v34 = vld [vmem:[#allocation4 + $0x30] sm:$0xff]
    %v35 = vld [vmem:[#allocation4 + $0x38] sm:$0xff]
    %v36 = vld [vmem:[#allocation4 + $0x40] sm:$0xff]
    %v37 = vld [vmem:[#allocation4 + $0x48] sm:$0xff]
    %v38 = vld [vmem:[#allocation4 + $0x50] sm:$0xff]
    %v39 = vld [vmem:[#allocation4 + $0x58] sm:$0xff]
    %v40 = vld [vmem:[#allocation4 + $0x60] sm:$0xff]
    %v41 = vld [vmem:[#allocation4 + $0x68] sm:$0xff]
    %v42 = vld [vmem:[#allocation4 + $0x70] sm:$0xff]
    %v43 = vld [vmem:[#allocation4 + $0x78] sm:$0xff]
    %v44 = vld [vmem:[#allocation4 + $0x80] sm:$0xff]
    %v45 = vld [vmem:[#allocation4 + $0x88] sm:$0xff]
    %v46 = vld [vmem:[#allocation4 + $0x90] sm:$0xff]
    %v47 = vld [vmem:[#allocation4 + $0x98] sm:$0xff]
    %v48 = vld [vmem:[#allocation4 + $0xa0] sm:$0xff]
    %v49 = vld [vmem:[#allocation4 + $0xa8] sm:$0xff]
    %v50 = vld [vmem:[#allocation4 + $0xb0] sm:$0xff]
    %v51 = vld [vmem:[#allocation4 + $0xb8] sm:$0xff]
    %v52 = vld [vmem:[#allocation4 + $0xc0] sm:$0xff]
    %v53 = vld [vmem:[#allocation4 + $0xc8] sm:$0xff]
    %v54 = vld [vmem:[#allocation4 + $0xd0] sm:$0xff]
    %v55 = vld [vmem:[#allocation4 + $0xd8] sm:$0xff]
    %v56 = vld [vmem:[#allocation4 + $0xe0] sm:$0xff]
    %v57 = vld [vmem:[#allocation4 + $0xe8] sm:$0xff]
    %v58 = vld [vmem:[#allocation4 + $0xf0] sm:$0xff]
    %v59 = vld [vmem:[#allocation4 + $0xf8] sm:$0xff]
    %v60 = vld [vmem:[#allocation4 + $0x100] sm:$0xff]
    %v61 = vld [vmem:[#allocation4 + $0x108] sm:$0xff]
    %v62 = vld [vmem:[#allocation4 + $0x110] sm:$0xff]
    %v63 = vld [vmem:[#allocation4 + $0x118] sm:$0xff]
    %v64 = vld [vmem:[#allocation4 + $0x120] sm:$0xff]
    %v65 = vld [vmem:[#allocation4 + $0x128] sm:$0xff]
    %v66 = vld [vmem:[#allocation4 + $0x130] sm:$0xff]
    %v67 = vld [vmem:[#allocation4 + $0x138] sm:$0xff]
    %v68 = vld [vmem:[#allocation4 + $0x140] sm:$0xff]
    %v69 = vld [vmem:[#allocation4 + $0x148] sm:$0xff]
    %v70 = vld [vmem:[#allocation4 + $0x150] sm:$0xff]
    %v71 = vld [vmem:[#allocation4 + $0x158] sm:$0xff]
    %v72 = vld [vmem:[#allocation4 + $0x160] sm:$0xff]
    %v73 = vld [vmem:[#allocation4 + $0x168] sm:$0xff]
    %v74 = vld [vmem:[#allocation4 + $0x170] sm:$0xff]
    %v75 = vld [vmem:[#allocation4 + $0x178] sm:$0xff]
    %v76 = vld [vmem:[#allocation4 + $0x180] sm:$0xff]
    %v77 = vld [vmem:[#allocation4 + $0x188] sm:$0xff]
    %v78 = vld [vmem:[#allocation4 + $0x190] sm:$0xff]
    %v79 = vld [vmem:[#allocation4 + $0x198] sm:$0xff]
    %v80 = vld [vmem:[#allocation4 + $0x1a0] sm:$0xff]
    %v81 = vld [vmem:[#allocation4 + $0x1a8] sm:$0xff]
    %v82 = vld [vmem:[#allocation4 + $0x1b0] sm:$0xff]
    %v83 = vld [vmem:[#allocation4 + $0x1b8] sm:$0xff]
    %v84 = vld [vmem:[#allocation4 + $0x1c0] sm:$0xff]
    %v85 = vld [vmem:[#allocation4 + $0x1c8] sm:$0xff]
    %v86 = vld [vmem:[#allocation4 + $0x1d0] sm:$0xff]
    %v87 = vld [vmem:[#allocation4 + $0x1d8] sm:$0xff]
    %v88 = vld [vmem:[#allocation4 + $0x1e0] sm:$0xff]
    %v89 = vld [vmem:[#allocation4 + $0x1e8] sm:$0xff]
    %v90 = vld [vmem:[#allocation4 + $0x1f0] sm:$0xff]
    %v91 = vld [vmem:[#allocation4 + $0x1f8] sm:$0xff]
    %v92 = vld [vmem:[#allocation4 + $0x200] sm:$0xff]
    %v93 = vld [vmem:[#allocation4 + $0x208] sm:$0xff]
    %v94 = vld [vmem:[#allocation4 + $0x210] sm:$0xff]
    %v95 = vld [vmem:[#allocation4 + $0x218] sm:$0xff]
    %v96 = vld [vmem:[#allocation4 + $0x220] sm:$0xff]
    %v97 = vld [vmem:[#allocation4 + $0x228] sm:$0xff]
    %v98 = vld [vmem:[#allocation4 + $0x230] sm:$0xff]
    %v99 = vld [vmem:[#allocation4 + $0x238] sm:$0xff]
    %v100 = vld [vmem:[#allocation4 + $0x240] sm:$0xff]
    %v101 = vld [vmem:[#allocation4 + $0x248] sm:$0xff]
    %v102 = vld [vmem:[#allocation4 + $0x250] sm:$0xff]
    %v103 = vld [vmem:[#allocation4 + $0x258] sm:$0xff]
    %v104 = vld [vmem:[#allocation4 + $0x260] sm:$0xff]
    %v105 = vld [vmem:[#allocation4 + $0x268] sm:$0xff]
    %v106 = vld [vmem:[#allocation4 + $0x270] sm:$0xff]
    %v107 = vld [vmem:[#allocation4 + $0x278] sm:$0xff]
    %v108 = vld [vmem:[#allocation4 + $0x280] sm:$0xff]
    %v109 = vld [vmem:[#allocation4 + $0x288] sm:$0xff]
    %v110 = vld [vmem:[#allocation4 + $0x290] sm:$0xff]
    %v111 = vld [vmem:[#allocation4 + $0x298] sm:$0xff]
    %v112 = vld [vmem:[#allocation4 + $0x2a0] sm:$0xff]
    %v113 = vld [vmem:[#allocation4 + $0x2a8] sm:$0xff]
    %v114 = vld [vmem:[#allocation4 + $0x2b0] sm:$0xff]
    %v115 = vld [vmem:[#allocation4 + $0x2b8] sm:$0xff]
    %v116 = vld [vmem:[#allocation4 + $0x2c0] sm:$0xff]
    %v117 = vld [vmem:[#allocation4 + $0x2c8] sm:$0xff]
    %v118 = vld [vmem:[#allocation4 + $0x2d0] sm:$0xff]
    %v119 = vld [vmem:[#allocation4 + $0x2d8] sm:$0xff]
    %v120 = vld [vmem:[#allocation4 + $0x2e0] sm:$0xff]
    %v121 = vld [vmem:[#allocation4 + $0x2e8] sm:$0xff]
    %v122 = vld [vmem:[#allocation4 + $0x2f0] sm:$0xff]
    %v123 = vld [vmem:[#allocation4 + $0x2f8] sm:$0xff]
    %v124 = vld [vmem:[#allocation4 + $0x300] sm:$0xff]
    %v125 = vld [vmem:[#allocation4 + $0x308] sm:$0xff]
    %v126 = vld [vmem:[#allocation4 + $0x310] sm:$0xff]
    %v127 = vld [vmem:[#allocation4 + $0x318] sm:$0xff]
    %v128 = vld [vmem:[#allocation4 + $0x320] sm:$0xff]
    %v129 = vld [vmem:[#allocation4 + $0x328] sm:$0xff]
    %v130 = vld [vmem:[#allocation4 + $0x330] sm:$0xff]
    %v131 = vld [vmem:[#allocation4 + $0x338] sm:$0xff]
    %v132 = vld [vmem:[#allocation4 + $0x340] sm:$0xff]
    %v133 = vld [vmem:[#allocation4 + $0x348] sm:$0xff]
    %v134 = vld [vmem:[#allocation4 + $0x350] sm:$0xff]
    %v135 = vld [vmem:[#allocation4 + $0x358] sm:$0xff]
    %v136 = vld [vmem:[#allocation4 + $0x360] sm:$0xff]
    %v137 = vld [vmem:[#allocation4 + $0x368] sm:$0xff]
    %v138 = vld [vmem:[#allocation4 + $0x370] sm:$0xff]
    %v139 = vld [vmem:[#allocation4 + $0x378] sm:$0xff]
    %v140 = vld [vmem:[#allocation4 + $0x380] sm:$0xff]
    %v141 = vld [vmem:[#allocation4 + $0x388] sm:$0xff]
    %v142 = vld [vmem:[#allocation4 + $0x390] sm:$0xff]
    %v143 = vld [vmem:[#allocation4 + $0x398] sm:$0xff]
    %v144 = vld [vmem:[#allocation4 + $0x3a0] sm:$0xff]
    %v145 = vld [vmem:[#allocation4 + $0x3a8] sm:$0xff]
    %v146 = vld [vmem:[#allocation4 + $0x3b0] sm:$0xff]
    %v147 = vld [vmem:[#allocation4 + $0x3b8] sm:$0xff]
    %v148 = vld [vmem:[#allocation4 + $0x3c0] sm:$0xff]
    %v149 = vld [vmem:[#allocation4 + $0x3c8] sm:$0xff]
    %v150 = vld [vmem:[#allocation4 + $0x3d0] sm:$0xff]
    %v151 = vld [vmem:[#allocation4 + $0x3d8] sm:$0xff]
    %v152 = vld [vmem:[#allocation4 + $0x3e0] sm:$0xff]
    %v153 = vld [vmem:[#allocation4 + $0x3e8] sm:$0xff]
    %v154 = vld [vmem:[#allocation4 + $0x3f0] sm:$0xff]
    %v155 = vld [vmem:[#allocation4 + $0x3f8] sm:$0xff]
    %v156 = vunpack.c.l.bf16 %v28
    %v157 = vunpack.c.h.bf16 %v28
    %v158 = vunpack.c.l.bf16 %v29
    %v159 = vunpack.c.h.bf16 %v29
    %v160 = vunpack.c.l.bf16 %v30
    %v161 = vunpack.c.h.bf16 %v30
    %v162 = vunpack.c.l.bf16 %v31
    %v163 = vunpack.c.h.bf16 %v31
    %v164 = vunpack.c.l.bf16 %v32
    %v165 = vunpack.c.h.bf16 %v32
    %v166 = vunpack.c.l.bf16 %v33
    %v167 = vunpack.c.h.bf16 %v33
    %v168 = vunpack.c.l.bf16 %v34
    %v169 = vunpack.c.h.bf16 %v34
    %v170 = vunpack.c.l.bf16 %v35
    %v171 = vunpack.c.h.bf16 %v35
    %v172 = vunpack.c.l.bf16 %v36
    %v173 = vunpack.c.h.bf16 %v36
    %v174 = vunpack.c.l.bf16 %v37
    %v175 = vunpack.c.h.bf16 %v37
    %v176 = vunpack.c.l.bf16 %v38
    %v177 = vunpack.c.h.bf16 %v38
    %v178 = vunpack.c.l.bf16 %v39
    %v179 = vunpack.c.h.bf16 %v39
    %v180 = vunpack.c.l.bf16 %v40
    %v181 = vunpack.c.h.bf16 %v40
    %v182 = vunpack.c.l.bf16 %v41
    %v183 = vunpack.c.h.bf16 %v41
    %v184 = vunpack.c.l.bf16 %v42
    %v185 = vunpack.c.h.bf16 %v42
    %v186 = vunpack.c.l.bf16 %v43
    %v187 = vunpack.c.h.bf16 %v43
    %v188 = vunpack.c.l.bf16 %v44
    %v189 = vunpack.c.h.bf16 %v44
    %v190 = vunpack.c.l.bf16 %v45
    %v191 = vunpack.c.h.bf16 %v45
    %v192 = vunpack.c.l.bf16 %v46
    %v193 = vunpack.c.h.bf16 %v46
    %v194 = vunpack.c.l.bf16 %v47
    %v195 = vunpack.c.h.bf16 %v47
    %v196 = vunpack.c.l.bf16 %v48
    %v197 = vunpack.c.h.bf16 %v48
    %v198 = vunpack.c.l.bf16 %v49
    %v199 = vunpack.c.h.bf16 %v49
    %v200 = vunpack.c.l.bf16 %v50
    %v201 = vunpack.c.h.bf16 %v50
    %v202 = vunpack.c.l.bf16 %v51
    %v203 = vunpack.c.h.bf16 %v51
    %v204 = vunpack.c.l.bf16 %v52
    %v205 = vunpack.c.h.bf16 %v52
    %v206 = vunpack.c.l.bf16 %v53
    %v207 = vunpack.c.h.bf16 %v53
    %v208 = vunpack.c.l.bf16 %v54
    %v209 = vunpack.c.h.bf16 %v54
    %v210 = vunpack.c.l.bf16 %v55
    %v211 = vunpack.c.h.bf16 %v55
    %v212 = vunpack.c.l.bf16 %v56
    %v213 = vunpack.c.h.bf16 %v56
    %v214 = vunpack.c.l.bf16 %v57
    %v215 = vunpack.c.h.bf16 %v57
    %v216 = vunpack.c.l.bf16 %v58
    %v217 = vunpack.c.h.bf16 %v58
    %v218 = vunpack.c.l.bf16 %v59
    %v219 = vunpack.c.h.bf16 %v59
    %v220 = vunpack.c.l.bf16 %v60
    %v221 = vunpack.c.h.bf16 %v60
    %v222 = vunpack.c.l.bf16 %v61
    %v223 = vunpack.c.h.bf16 %v61
    %v224 = vunpack.c.l.bf16 %v62
    %v225 = vunpack.c.h.bf16 %v62
    %v226 = vunpack.c.l.bf16 %v63
    %v227 = vunpack.c.h.bf16 %v63
    %v228 = vunpack.c.l.bf16 %v64
    %v229 = vunpack.c.h.bf16 %v64
    %v230 = vunpack.c.l.bf16 %v65
    %v231 = vunpack.c.h.bf16 %v65
    %v232 = vunpack.c.l.bf16 %v66
    %v233 = vunpack.c.h.bf16 %v66
    %v234 = vunpack.c.l.bf16 %v67
    %v235 = vunpack.c.h.bf16 %v67
    %v236 = vunpack.c.l.bf16 %v68
    %v237 = vunpack.c.h.bf16 %v68
    %v238 = vunpack.c.l.bf16 %v69
    %v239 = vunpack.c.h.bf16 %v69
    %v240 = vunpack.c.l.bf16 %v70
    %v241 = vunpack.c.h.bf16 %v70
    %v242 = vunpack.c.l.bf16 %v71
    %v243 = vunpack.c.h.bf16 %v71
    %v244 = vunpack.c.l.bf16 %v72
    %v245 = vunpack.c.h.bf16 %v72
    %v246 = vunpack.c.l.bf16 %v73
    %v247 = vunpack.c.h.bf16 %v73
    %v248 = vunpack.c.l.bf16 %v74
    %v249 = vunpack.c.h.bf16 %v74
    %v250 = vunpack.c.l.bf16 %v75
    %v251 = vunpack.c.h.bf16 %v75
    %v252 = vunpack.c.l.bf16 %v76
    %v253 = vunpack.c.h.bf16 %v76
    %v254 = vunpack.c.l.bf16 %v77
    %v255 = vunpack.c.h.bf16 %v77
    %v256 = vunpack.c.l.bf16 %v78
    %v257 = vunpack.c.h.bf16 %v78
    %v258 = vunpack.c.l.bf16 %v79
    %v259 = vunpack.c.h.bf16 %v79
    %v260 = vunpack.c.l.bf16 %v80
    %v261 = vunpack.c.h.bf16 %v80
    %v262 = vunpack.c.l.bf16 %v81
    %v263 = vunpack.c.h.bf16 %v81
    %v264 = vunpack.c.l.bf16 %v82
    %v265 = vunpack.c.h.bf16 %v82
    %v266 = vunpack.c.l.bf16 %v83
    %v267 = vunpack.c.h.bf16 %v83
    %v268 = vunpack.c.l.bf16 %v84
    %v269 = vunpack.c.h.bf16 %v84
    %v270 = vunpack.c.l.bf16 %v85
    %v271 = vunpack.c.h.bf16 %v85
    %v272 = vunpack.c.l.bf16 %v86
    %v273 = vunpack.c.h.bf16 %v86
    %v274 = vunpack.c.l.bf16 %v87
    %v275 = vunpack.c.h.bf16 %v87
    %v276 = vunpack.c.l.bf16 %v88
    %v277 = vunpack.c.h.bf16 %v88
    %v278 = vunpack.c.l.bf16 %v89
    %v279 = vunpack.c.h.bf16 %v89
    %v280 = vunpack.c.l.bf16 %v90
    %v281 = vunpack.c.h.bf16 %v90
    %v282 = vunpack.c.l.bf16 %v91
    %v283 = vunpack.c.h.bf16 %v91
    %v284 = vunpack.c.l.bf16 %v92
    %v285 = vunpack.c.h.bf16 %v92
    %v286 = vunpack.c.l.bf16 %v93
    %v287 = vunpack.c.h.bf16 %v93
    %v288 = vunpack.c.l.bf16 %v94
    %v289 = vunpack.c.h.bf16 %v94
    %v290 = vunpack.c.l.bf16 %v95
    %v291 = vunpack.c.h.bf16 %v95
    %v292 = vunpack.c.l.bf16 %v96
    %v293 = vunpack.c.h.bf16 %v96
    %v294 = vunpack.c.l.bf16 %v97
    %v295 = vunpack.c.h.bf16 %v97
    %v296 = vunpack.c.l.bf16 %v98
    %v297 = vunpack.c.h.bf16 %v98
    %v298 = vunpack.c.l.bf16 %v99
    %v299 = vunpack.c.h.bf16 %v99
    %v300 = vunpack.c.l.bf16 %v100
    %v301 = vunpack.c.h.bf16 %v100
    %v302 = vunpack.c.l.bf16 %v101
    %v303 = vunpack.c.h.bf16 %v101
    %v304 = vunpack.c.l.bf16 %v102
    %v305 = vunpack.c.h.bf16 %v102
    %v306 = vunpack.c.l.bf16 %v103
    %v307 = vunpack.c.h.bf16 %v103
    %v308 = vunpack.c.l.bf16 %v104
    %v309 = vunpack.c.h.bf16 %v104
    %v310 = vunpack.c.l.bf16 %v105
    %v311 = vunpack.c.h.bf16 %v105
    %v312 = vunpack.c.l.bf16 %v106
    %v313 = vunpack.c.h.bf16 %v106
    %v314 = vunpack.c.l.bf16 %v107
    %v315 = vunpack.c.h.bf16 %v107
    %v316 = vunpack.c.l.bf16 %v108
    %v317 = vunpack.c.h.bf16 %v108
    %v318 = vunpack.c.l.bf16 %v109
    %v319 = vunpack.c.h.bf16 %v109
    %v320 = vunpack.c.l.bf16 %v110
    %v321 = vunpack.c.h.bf16 %v110
    %v322 = vunpack.c.l.bf16 %v111
    %v323 = vunpack.c.h.bf16 %v111
    %v324 = vunpack.c.l.bf16 %v112
    %v325 = vunpack.c.h.bf16 %v112
    %v326 = vunpack.c.l.bf16 %v113
    %v327 = vunpack.c.h.bf16 %v113
    %v328 = vunpack.c.l.bf16 %v114
    %v329 = vunpack.c.h.bf16 %v114
    %v330 = vunpack.c.l.bf16 %v115
    %v331 = vunpack.c.h.bf16 %v115
    %v332 = vunpack.c.l.bf16 %v116
    %v333 = vunpack.c.h.bf16 %v116
    %v334 = vunpack.c.l.bf16 %v117
    %v335 = vunpack.c.h.bf16 %v117
    %v336 = vunpack.c.l.bf16 %v118
    %v337 = vunpack.c.h.bf16 %v118
    %v338 = vunpack.c.l.bf16 %v119
    %v339 = vunpack.c.h.bf16 %v119
    %v340 = vunpack.c.l.bf16 %v120
    %v341 = vunpack.c.h.bf16 %v120
    %v342 = vunpack.c.l.bf16 %v121
    %v343 = vunpack.c.h.bf16 %v121
    %v344 = vunpack.c.l.bf16 %v122
    %v345 = vunpack.c.h.bf16 %v122
    %v346 = vunpack.c.l.bf16 %v123
    %v347 = vunpack.c.h.bf16 %v123
    %v348 = vunpack.c.l.bf16 %v124
    %v349 = vunpack.c.h.bf16 %v124
    %v350 = vunpack.c.l.bf16 %v125
    %v351 = vunpack.c.h.bf16 %v125
    %v352 = vunpack.c.l.bf16 %v126
    %v353 = vunpack.c.h.bf16 %v126
    %v354 = vunpack.c.l.bf16 %v127
    %v355 = vunpack.c.h.bf16 %v127
    %v356 = vunpack.c.l.bf16 %v128
    %v357 = vunpack.c.h.bf16 %v128
    %v358 = vunpack.c.l.bf16 %v129
    %v359 = vunpack.c.h.bf16 %v129
    %v360 = vunpack.c.l.bf16 %v130
    %v361 = vunpack.c.h.bf16 %v130
    %v362 = vunpack.c.l.bf16 %v131
    %v363 = vunpack.c.h.bf16 %v131
    %v364 = vunpack.c.l.bf16 %v132
    %v365 = vunpack.c.h.bf16 %v132
    %v366 = vunpack.c.l.bf16 %v133
    %v367 = vunpack.c.h.bf16 %v133
    %v368 = vunpack.c.l.bf16 %v134
    %v369 = vunpack.c.h.bf16 %v134
    %v370 = vunpack.c.l.bf16 %v135
    %v371 = vunpack.c.h.bf16 %v135
    %v372 = vunpack.c.l.bf16 %v136
    %v373 = vunpack.c.h.bf16 %v136
    %v374 = vunpack.c.l.bf16 %v137
    %v375 = vunpack.c.h.bf16 %v137
    %v376 = vunpack.c.l.bf16 %v138
    %v377 = vunpack.c.h.bf16 %v138
    %v378 = vunpack.c.l.bf16 %v139
    %v379 = vunpack.c.h.bf16 %v139
    %v380 = vunpack.c.l.bf16 %v140
    %v381 = vunpack.c.h.bf16 %v140
    %v382 = vunpack.c.l.bf16 %v141
    %v383 = vunpack.c.h.bf16 %v141
    %v384 = vunpack.c.l.bf16 %v142
    %v385 = vunpack.c.h.bf16 %v142
    %v386 = vunpack.c.l.bf16 %v143
    %v387 = vunpack.c.h.bf16 %v143
    %v388 = vunpack.c.l.bf16 %v144
    %v389 = vunpack.c.h.bf16 %v144
    %v390 = vunpack.c.l.bf16 %v145
    %v391 = vunpack.c.h.bf16 %v145
    %v392 = vunpack.c.l.bf16 %v146
    %v393 = vunpack.c.h.bf16 %v146
    %v394 = vunpack.c.l.bf16 %v147
    %v395 = vunpack.c.h.bf16 %v147
    %v396 = vunpack.c.l.bf16 %v148
    %v397 = vunpack.c.h.bf16 %v148
    %v398 = vunpack.c.l.bf16 %v149
    %v399 = vunpack.c.h.bf16 %v149
    %v400 = vunpack.c.l.bf16 %v150
    %v401 = vunpack.c.h.bf16 %v150
    %v402 = vunpack.c.l.bf16 %v151
    %v403 = vunpack.c.h.bf16 %v151
    %v404 = vunpack.c.l.bf16 %v152
    %v405 = vunpack.c.h.bf16 %v152
    %v406 = vunpack.c.l.bf16 %v153
    %v407 = vunpack.c.h.bf16 %v153
    %v408 = vunpack.c.l.bf16 %v154
    %v409 = vunpack.c.h.bf16 %v154
    %v410 = vunpack.c.l.bf16 %v155
    %v411 = vunpack.c.h.bf16 %v155
    %s412 = sld [smem:[#allocation3]]
    %v413 = vstv %s412
    %v414 = vmul.f32 %v413, %v156
    %v415 = vmul.f32 %v413, %v157
    %v416 = vmul.f32 %v413, %v158
    %v417 = vmul.f32 %v413, %v159
    %v418 = vmul.f32 %v413, %v160
    %v419 = vmul.f32 %v413, %v161
    %v420 = vmul.f32 %v413, %v162
    %v421 = vmul.f32 %v413, %v163
    %v422 = vmul.f32 %v413, %v164
    %v423 = vmul.f32 %v413, %v165
    %v424 = vmul.f32 %v413, %v166
    %v425 = vmul.f32 %v413, %v167
    %v426 = vmul.f32 %v413, %v168
    %v427 = vmul.f32 %v413, %v169
    %v428 = vmul.f32 %v413, %v170
    %v429 = vmul.f32 %v413, %v171
    %v430 = vmul.f32 %v413, %v172
    %v431 = vmul.f32 %v413, %v173
    %v432 = vmul.f32 %v413, %v174
    %v433 = vmul.f32 %v413, %v175
    %v434 = vmul.f32 %v413, %v176
    %v435 = vmul.f32 %v413, %v177
    %v436 = vmul.f32 %v413, %v178
    %v437 = vmul.f32 %v413, %v179
    %v438 = vmul.f32 %v413, %v180
    %v439 = vmul.f32 %v413, %v181
    %v440 = vmul.f32 %v413, %v182
    %v441 = vmul.f32 %v413, %v183
    %v442 = vmul.f32 %v413, %v184
    %v443 = vmul.f32 %v413, %v185
    %v444 = vmul.f32 %v413, %v186
    %v445 = vmul.f32 %v413, %v187
    %v446 = vmul.f32 %v413, %v188
    %v447 = vmul.f32 %v413, %v189
    %v448 = vmul.f32 %v413, %v190
    %v449 = vmul.f32 %v413, %v191
    %v450 = vmul.f32 %v413, %v192
    %v451 = vmul.f32 %v413, %v193
    %v452 = vmul.f32 %v413, %v194
    %v453 = vmul.f32 %v413, %v195
    %v454 = vmul.f32 %v413, %v196
    %v455 = vmul.f32 %v413, %v197
    %v456 = vmul.f32 %v413, %v198
    %v457 = vmul.f32 %v413, %v199
    %v458 = vmul.f32 %v413, %v200
    %v459 = vmul.f32 %v413, %v201
    %v460 = vmul.f32 %v413, %v202
    %v461 = vmul.f32 %v413, %v203
    %v462 = vmul.f32 %v413, %v204
    %v463 = vmul.f32 %v413, %v205
    %v464 = vmul.f32 %v413, %v206
    %v465 = vmul.f32 %v413, %v207
    %v466 = vmul.f32 %v413, %v208
    %v467 = vmul.f32 %v413, %v209
    %v468 = vmul.f32 %v413, %v210
    %v469 = vmul.f32 %v413, %v211
    %v470 = vmul.f32 %v413, %v212
    %v471 = vmul.f32 %v413, %v213
    %v472 = vmul.f32 %v413, %v214
    %v473 = vmul.f32 %v413, %v215
    %v474 = vmul.f32 %v413, %v216
    %v475 = vmul.f32 %v413, %v217
    %v476 = vmul.f32 %v413, %v218
    %v477 = vmul.f32 %v413, %v219
    %s478 = sld [smem:[#allocation3 + $0x1]]
    %v479 = vstv %s478
    %v480 = vmul.f32 %v479, %v220
    %v481 = vmul.f32 %v479, %v221
    %v482 = vmul.f32 %v479, %v222
    %v483 = vmul.f32 %v479, %v223
    %v484 = vmul.f32 %v479, %v224
    %v485 = vmul.f32 %v479, %v225
    %v486 = vmul.f32 %v479, %v226
    %v487 = vmul.f32 %v479, %v227
    %v488 = vmul.f32 %v479, %v228
    %v489 = vmul.f32 %v479, %v229
    %v490 = vmul.f32 %v479, %v230
    %v491 = vmul.f32 %v479, %v231
    %v492 = vmul.f32 %v479, %v232
    %v493 = vmul.f32 %v479, %v233
    %v494 = vmul.f32 %v479, %v234
    %v495 = vmul.f32 %v479, %v235
    %v496 = vmul.f32 %v479, %v236
    %v497 = vmul.f32 %v479, %v237
    %v498 = vmul.f32 %v479, %v238
    %v499 = vmul.f32 %v479, %v239
    %v500 = vmul.f32 %v479, %v240
    %v501 = vmul.f32 %v479, %v241
    %v502 = vmul.f32 %v479, %v242
    %v503 = vmul.f32 %v479, %v243
    %v504 = vmul.f32 %v479, %v244
    %v505 = vmul.f32 %v479, %v245
    %v506 = vmul.f32 %v479, %v246
    %v507 = vmul.f32 %v479, %v247
    %v508 = vmul.f32 %v479, %v248
    %v509 = vmul.f32 %v479, %v249
    %v510 = vmul.f32 %v479, %v250
    %v511 = vmul.f32 %v479, %v251
    %v512 = vmul.f32 %v479, %v252
    %v513 = vmul.f32 %v479, %v253
    %v514 = vmul.f32 %v479, %v254
    %v515 = vmul.f32 %v479, %v255
    %v516 = vmul.f32 %v479, %v256
    %v517 = vmul.f32 %v479, %v257
    %v518 = vmul.f32 %v479, %v258
    %v519 = vmul.f32 %v479, %v259
    %v520 = vmul.f32 %v479, %v260
    %v521 = vmul.f32 %v479, %v261
    %v522 = vmul.f32 %v479, %v262
    %v523 = vmul.f32 %v479, %v263
    %v524 = vmul.f32 %v479, %v264
    %v525 = vmul.f32 %v479, %v265
    %v526 = vmul.f32 %v479, %v266
    %v527 = vmul.f32 %v479, %v267
    %v528 = vmul.f32 %v479, %v268
    %v529 = vmul.f32 %v479, %v269
    %v530 = vmul.f32 %v479, %v270
    %v531 = vmul.f32 %v479, %v271
    %v532 = vmul.f32 %v479, %v272
    %v533 = vmul.f32 %v479, %v273
    %v534 = vmul.f32 %v479, %v274
    %v535 = vmul.f32 %v479, %v275
    %v536 = vmul.f32 %v479, %v276
    %v537 = vmul.f32 %v479, %v277
    %v538 = vmul.f32 %v479, %v278
    %v539 = vmul.f32 %v479, %v279
    %v540 = vmul.f32 %v479, %v280
    %v541 = vmul.f32 %v479, %v281
    %v542 = vmul.f32 %v479, %v282
    %v543 = vmul.f32 %v479, %v283
    %v544 = vadd.f32 %v414, %v480
    %v545 = vadd.f32 %v415, %v481
    %v546 = vadd.f32 %v416, %v482
    %v547 = vadd.f32 %v417, %v483
    %v548 = vadd.f32 %v418, %v484
    %v549 = vadd.f32 %v419, %v485
    %v550 = vadd.f32 %v420, %v486
    %v551 = vadd.f32 %v421, %v487
    %v552 = vadd.f32 %v422, %v488
    %v553 = vadd.f32 %v423, %v489
    %v554 = vadd.f32 %v424, %v490
    %v555 = vadd.f32 %v425, %v491
    %v556 = vadd.f32 %v426, %v492
    %v557 = vadd.f32 %v427, %v493
    %v558 = vadd.f32 %v428, %v494
    %v559 = vadd.f32 %v429, %v495
    %v560 = vadd.f32 %v430, %v496
    %v561 = vadd.f32 %v431, %v497
    %v562 = vadd.f32 %v432, %v498
    %v563 = vadd.f32 %v433, %v499
    %v564 = vadd.f32 %v434, %v500
    %v565 = vadd.f32 %v435, %v501
    %v566 = vadd.f32 %v436, %v502
    %v567 = vadd.f32 %v437, %v503
    %v568 = vadd.f32 %v438, %v504
    %v569 = vadd.f32 %v439, %v505
    %v570 = vadd.f32 %v440, %v506
    %v571 = vadd.f32 %v441, %v507
    %v572 = vadd.f32 %v442, %v508
    %v573 = vadd.f32 %v443, %v509
    %v574 = vadd.f32 %v444, %v510
    %v575 = vadd.f32 %v445, %v511
    %v576 = vadd.f32 %v446, %v512
    %v577 = vadd.f32 %v447, %v513
    %v578 = vadd.f32 %v448, %v514
    %v579 = vadd.f32 %v449, %v515
    %v580 = vadd.f32 %v450, %v516
    %v581 = vadd.f32 %v451, %v517
    %v582 = vadd.f32 %v452, %v518
    %v583 = vadd.f32 %v453, %v519
    %v584 = vadd.f32 %v454, %v520
    %v585 = vadd.f32 %v455, %v521
    %v586 = vadd.f32 %v456, %v522
    %v587 = vadd.f32 %v457, %v523
    %v588 = vadd.f32 %v458, %v524
    %v589 = vadd.f32 %v459, %v525
    %v590 = vadd.f32 %v460, %v526
    %v591 = vadd.f32 %v461, %v527
    %v592 = vadd.f32 %v462, %v528
    %v593 = vadd.f32 %v463, %v529
    %v594 = vadd.f32 %v464, %v530
    %v595 = vadd.f32 %v465, %v531
    %v596 = vadd.f32 %v466, %v532
    %v597 = vadd.f32 %v467, %v533
    %v598 = vadd.f32 %v468, %v534
    %v599 = vadd.f32 %v469, %v535
    %v600 = vadd.f32 %v470, %v536
    %v601 = vadd.f32 %v471, %v537
    %v602 = vadd.f32 %v472, %v538
    %v603 = vadd.f32 %v473, %v539
    %v604 = vadd.f32 %v474, %v540
    %v605 = vadd.f32 %v475, %v541
    %v606 = vadd.f32 %v476, %v542
    %v607 = vadd.f32 %v477, %v543
    %s608 = sld [smem:[#allocation3 + $0x2]]
    %v609 = vstv %s608
    %v610 = vmul.f32 %v609, %v284
    %v611 = vmul.f32 %v609, %v285
    %v612 = vmul.f32 %v609, %v286
    %v613 = vmul.f32 %v609, %v287
    %v614 = vmul.f32 %v609, %v288
    %v615 = vmul.f32 %v609, %v289
    %v616 = vmul.f32 %v609, %v290
    %v617 = vmul.f32 %v609, %v291
    %v618 = vmul.f32 %v609, %v292
    %v619 = vmul.f32 %v609, %v293
    %v620 = vmul.f32 %v609, %v294
    %v621 = vmul.f32 %v609, %v295
    %v622 = vmul.f32 %v609, %v296
    %v623 = vmul.f32 %v609, %v297
    %v624 = vmul.f32 %v609, %v298
    %v625 = vmul.f32 %v609, %v299
    %v626 = vmul.f32 %v609, %v300
    %v627 = vmul.f32 %v609, %v301
    %v628 = vmul.f32 %v609, %v302
    %v629 = vmul.f32 %v609, %v303
    %v630 = vmul.f32 %v609, %v304
    %v631 = vmul.f32 %v609, %v305
    %v632 = vmul.f32 %v609, %v306
    %v633 = vmul.f32 %v609, %v307
    %v634 = vmul.f32 %v609, %v308
    %v635 = vmul.f32 %v609, %v309
    %v636 = vmul.f32 %v609, %v310
    %v637 = vmul.f32 %v609, %v311
    %v638 = vmul.f32 %v609, %v312
    %v639 = vmul.f32 %v609, %v313
    %v640 = vmul.f32 %v609, %v314
    %v641 = vmul.f32 %v609, %v315
    %v642 = vmul.f32 %v609, %v316
    %v643 = vmul.f32 %v609, %v317
    %v644 = vmul.f32 %v609, %v318
    %v645 = vmul.f32 %v609, %v319
    %v646 = vmul.f32 %v609, %v320
    %v647 = vmul.f32 %v609, %v321
    %v648 = vmul.f32 %v609, %v322
    %v649 = vmul.f32 %v609, %v323
    %v650 = vmul.f32 %v609, %v324
    %v651 = vmul.f32 %v609, %v325
    %v652 = vmul.f32 %v609, %v326
    %v653 = vmul.f32 %v609, %v327
    %v654 = vmul.f32 %v609, %v328
    %v655 = vmul.f32 %v609, %v329
    %v656 = vmul.f32 %v609, %v330
    %v657 = vmul.f32 %v609, %v331
    %v658 = vmul.f32 %v609, %v332
    %v659 = vmul.f32 %v609, %v333
    %v660 = vmul.f32 %v609, %v334
    %v661 = vmul.f32 %v609, %v335
    %v662 = vmul.f32 %v609, %v336
    %v663 = vmul.f32 %v609, %v337
    %v664 = vmul.f32 %v609, %v338
    %v665 = vmul.f32 %v609, %v339
    %v666 = vmul.f32 %v609, %v340
    %v667 = vmul.f32 %v609, %v341
    %v668 = vmul.f32 %v609, %v342
    %v669 = vmul.f32 %v609, %v343
    %v670 = vmul.f32 %v609, %v344
    %v671 = vmul.f32 %v609, %v345
    %v672 = vmul.f32 %v609, %v346
    %v673 = vmul.f32 %v609, %v347
    %v674 = vadd.f32 %v544, %v610
    %v675 = vadd.f32 %v545, %v611
    %v676 = vadd.f32 %v546, %v612
    %v677 = vadd.f32 %v547, %v613
    %v678 = vadd.f32 %v548, %v614
    %v679 = vadd.f32 %v549, %v615
    %v680 = vadd.f32 %v550, %v616
    %v681 = vadd.f32 %v551, %v617
    %v682 = vadd.f32 %v552, %v618
    %v683 = vadd.f32 %v553, %v619
    %v684 = vadd.f32 %v554, %v620
    %v685 = vadd.f32 %v555, %v621
    %v686 = vadd.f32 %v556, %v622
    %v687 = vadd.f32 %v557, %v623
    %v688 = vadd.f32 %v558, %v624
    %v689 = vadd.f32 %v559, %v625
    %v690 = vadd.f32 %v560, %v626
    %v691 = vadd.f32 %v561, %v627
    %v692 = vadd.f32 %v562, %v628
    %v693 = vadd.f32 %v563, %v629
    %v694 = vadd.f32 %v564, %v630
    %v695 = vadd.f32 %v565, %v631
    %v696 = vadd.f32 %v566, %v632
    %v697 = vadd.f32 %v567, %v633
    %v698 = vadd.f32 %v568, %v634
    %v699 = vadd.f32 %v569, %v635
    %v700 = vadd.f32 %v570, %v636
    %v701 = vadd.f32 %v571, %v637
    %v702 = vadd.f32 %v572, %v638
    %v703 = vadd.f32 %v573, %v639
    %v704 = vadd.f32 %v574, %v640
    %v705 = vadd.f32 %v575, %v641
    %v706 = vadd.f32 %v576, %v642
    %v707 = vadd.f32 %v577, %v643
    %v708 = vadd.f32 %v578, %v644
    %v709 = vadd.f32 %v579, %v645
    %v710 = vadd.f32 %v580, %v646
    %v711 = vadd.f32 %v581, %v647
    %v712 = vadd.f32 %v582, %v648
    %v713 = vadd.f32 %v583, %v649
    %v714 = vadd.f32 %v584, %v650
    %v715 = vadd.f32 %v585, %v651
    %v716 = vadd.f32 %v586, %v652
    %v717 = vadd.f32 %v587, %v653
    %v718 = vadd.f32 %v588, %v654
    %v719 = vadd.f32 %v589, %v655
    %v720 = vadd.f32 %v590, %v656
    %v721 = vadd.f32 %v591, %v657
    %v722 = vadd.f32 %v592, %v658
    %v723 = vadd.f32 %v593, %v659
    %v724 = vadd.f32 %v594, %v660
    %v725 = vadd.f32 %v595, %v661
    %v726 = vadd.f32 %v596, %v662
    %v727 = vadd.f32 %v597, %v663
    %v728 = vadd.f32 %v598, %v664
    %v729 = vadd.f32 %v599, %v665
    %v730 = vadd.f32 %v600, %v666
    %v731 = vadd.f32 %v601, %v667
    %v732 = vadd.f32 %v602, %v668
    %v733 = vadd.f32 %v603, %v669
    %v734 = vadd.f32 %v604, %v670
    %v735 = vadd.f32 %v605, %v671
    %v736 = vadd.f32 %v606, %v672
    %v737 = vadd.f32 %v607, %v673
    %s738 = sld [smem:[#allocation3 + $0x3]]
    %v739 = vstv %s738
    %v740 = vmul.f32 %v739, %v348
    %v741 = vmul.f32 %v739, %v349
    %v742 = vmul.f32 %v739, %v350
    %v743 = vmul.f32 %v739, %v351
    %v744 = vmul.f32 %v739, %v352
    %v745 = vmul.f32 %v739, %v353
    %v746 = vmul.f32 %v739, %v354
    %v747 = vmul.f32 %v739, %v355
    %v748 = vmul.f32 %v739, %v356
    %v749 = vmul.f32 %v739, %v357
    %v750 = vmul.f32 %v739, %v358
    %v751 = vmul.f32 %v739, %v359
    %v752 = vmul.f32 %v739, %v360
    %v753 = vmul.f32 %v739, %v361
    %v754 = vmul.f32 %v739, %v362
    %v755 = vmul.f32 %v739, %v363
    %v756 = vmul.f32 %v739, %v364
    %v757 = vmul.f32 %v739, %v365
    %v758 = vmul.f32 %v739, %v366
    %v759 = vmul.f32 %v739, %v367
    %v760 = vmul.f32 %v739, %v368
    %v761 = vmul.f32 %v739, %v369
    %v762 = vmul.f32 %v739, %v370
    %v763 = vmul.f32 %v739, %v371
    %v764 = vmul.f32 %v739, %v372
    %v765 = vmul.f32 %v739, %v373
    %v766 = vmul.f32 %v739, %v374
    %v767 = vmul.f32 %v739, %v375
    %v768 = vmul.f32 %v739, %v376
    %v769 = vmul.f32 %v739, %v377
    %v770 = vmul.f32 %v739, %v378
    %v771 = vmul.f32 %v739, %v379
    %v772 = vmul.f32 %v739, %v380
    %v773 = vmul.f32 %v739, %v381
    %v774 = vmul.f32 %v739, %v382
    %v775 = vmul.f32 %v739, %v383
    %v776 = vmul.f32 %v739, %v384
    %v777 = vmul.f32 %v739, %v385
    %v778 = vmul.f32 %v739, %v386
    %v779 = vmul.f32 %v739, %v387
    %v780 = vmul.f32 %v739, %v388
    %v781 = vmul.f32 %v739, %v389
    %v782 = vmul.f32 %v739, %v390
    %v783 = vmul.f32 %v739, %v391
    %v784 = vmul.f32 %v739, %v392
    %v785 = vmul.f32 %v739, %v393
    %v786 = vmul.f32 %v739, %v394
    %v787 = vmul.f32 %v739, %v395
    %v788 = vmul.f32 %v739, %v396
    %v789 = vmul.f32 %v739, %v397
    %v790 = vmul.f32 %v739, %v398
    %v791 = vmul.f32 %v739, %v399
    %v792 = vmul.f32 %v739, %v400
    %v793 = vmul.f32 %v739, %v401
    %v794 = vmul.f32 %v739, %v402
    %v795 = vmul.f32 %v739, %v403
    %v796 = vmul.f32 %v739, %v404
    %v797 = vmul.f32 %v739, %v405
    %v798 = vmul.f32 %v739, %v406
    %v799 = vmul.f32 %v739, %v407
    %v800 = vmul.f32 %v739, %v408
    %v801 = vmul.f32 %v739, %v409
    %v802 = vmul.f32 %v739, %v410
    %v803 = vmul.f32 %v739, %v411
    %v804 = vadd.f32 %v674, %v740
    %v805 = vadd.f32 %v675, %v741
    %v806 = vadd.f32 %v676, %v742
    %v807 = vadd.f32 %v677, %v743
    %v808 = vadd.f32 %v678, %v744
    %v809 = vadd.f32 %v679, %v745
    %v810 = vadd.f32 %v680, %v746
    %v811 = vadd.f32 %v681, %v747
    %v812 = vadd.f32 %v682, %v748
    %v813 = vadd.f32 %v683, %v749
    %v814 = vadd.f32 %v684, %v750
    %v815 = vadd.f32 %v685, %v751
    %v816 = vadd.f32 %v686, %v752
    %v817 = vadd.f32 %v687, %v753
    %v818 = vadd.f32 %v688, %v754
    %v819 = vadd.f32 %v689, %v755
    %v820 = vadd.f32 %v690, %v756
    %v821 = vadd.f32 %v691, %v757
    %v822 = vadd.f32 %v692, %v758
    %v823 = vadd.f32 %v693, %v759
    %v824 = vadd.f32 %v694, %v760
    %v825 = vadd.f32 %v695, %v761
    %v826 = vadd.f32 %v696, %v762
    %v827 = vadd.f32 %v697, %v763
    %v828 = vadd.f32 %v698, %v764
    %v829 = vadd.f32 %v699, %v765
    %v830 = vadd.f32 %v700, %v766
    %v831 = vadd.f32 %v701, %v767
    %v832 = vadd.f32 %v702, %v768
    %v833 = vadd.f32 %v703, %v769
    %v834 = vadd.f32 %v704, %v770
    %v835 = vadd.f32 %v705, %v771
    %v836 = vadd.f32 %v706, %v772
    %v837 = vadd.f32 %v707, %v773
    %v838 = vadd.f32 %v708, %v774
    %v839 = vadd.f32 %v709, %v775
    %v840 = vadd.f32 %v710, %v776
    %v841 = vadd.f32 %v711, %v777
    %v842 = vadd.f32 %v712, %v778
    %v843 = vadd.f32 %v713, %v779
    %v844 = vadd.f32 %v714, %v780
    %v845 = vadd.f32 %v715, %v781
    %v846 = vadd.f32 %v716, %v782
    %v847 = vadd.f32 %v717, %v783
    %v848 = vadd.f32 %v718, %v784
    %v849 = vadd.f32 %v719, %v785
    %v850 = vadd.f32 %v720, %v786
    %v851 = vadd.f32 %v721, %v787
    %v852 = vadd.f32 %v722, %v788
    %v853 = vadd.f32 %v723, %v789
    %v854 = vadd.f32 %v724, %v790
    %v855 = vadd.f32 %v725, %v791
    %v856 = vadd.f32 %v726, %v792
    %v857 = vadd.f32 %v727, %v793
    %v858 = vadd.f32 %v728, %v794
    %v859 = vadd.f32 %v729, %v795
    %v860 = vadd.f32 %v730, %v796
    %v861 = vadd.f32 %v731, %v797
    %v862 = vadd.f32 %v732, %v798
    %v863 = vadd.f32 %v733, %v799
    %v864 = vadd.f32 %v734, %v800
    %v865 = vadd.f32 %v735, %v801
    %v866 = vadd.f32 %v736, %v802
    %v867 = vadd.f32 %v737, %v803
    %v868 = vpack.c.bf16 %v806, %v804
    %v869 = vpack.c.bf16 %v807, %v805
    %v870 = vpack.c.bf16 %v810, %v808
    %v871 = vpack.c.bf16 %v811, %v809
    %v872 = vpack.c.bf16 %v814, %v812
    %v873 = vpack.c.bf16 %v815, %v813
    %v874 = vpack.c.bf16 %v818, %v816
    %v875 = vpack.c.bf16 %v819, %v817
    %v876 = vpack.c.bf16 %v822, %v820
    %v877 = vpack.c.bf16 %v823, %v821
    %v878 = vpack.c.bf16 %v826, %v824
    %v879 = vpack.c.bf16 %v827, %v825
    %v880 = vpack.c.bf16 %v830, %v828
    %v881 = vpack.c.bf16 %v831, %v829
    %v882 = vpack.c.bf16 %v834, %v832
    %v883 = vpack.c.bf16 %v835, %v833
    %v884 = vpack.c.bf16 %v838, %v836
    %v885 = vpack.c.bf16 %v839, %v837
    %v886 = vpack.c.bf16 %v842, %v840
    %v887 = vpack.c.bf16 %v843, %v841
    %v888 = vpack.c.bf16 %v846, %v844
    %v889 = vpack.c.bf16 %v847, %v845
    %v890 = vpack.c.bf16 %v850, %v848
    %v891 = vpack.c.bf16 %v851, %v849
    %v892 = vpack.c.bf16 %v854, %v852
    %v893 = vpack.c.bf16 %v855, %v853
    %v894 = vpack.c.bf16 %v858, %v856
    %v895 = vpack.c.bf16 %v859, %v857
    %v896 = vpack.c.bf16 %v862, %v860
    %v897 = vpack.c.bf16 %v863, %v861
    %v898 = vpack.c.bf16 %v866, %v864
    %v899 = vpack.c.bf16 %v867, %v865
    %v932 = vunpack.c.l.b16 %v868
    %v933 = vunpack.c.l.b16 %v869
    %v934 = vunpack.c.h.b16 %v868
    %v935 = vunpack.c.h.b16 %v869
    %v936 = vunpack.c.l.b16 %v870
    %v937 = vunpack.c.l.b16 %v871
    %v938 = vunpack.c.h.b16 %v870
    %v939 = vunpack.c.h.b16 %v871
    %v940 = vunpack.c.l.b16 %v872
    %v941 = vunpack.c.l.b16 %v873
    %v942 = vunpack.c.h.b16 %v872
    %v943 = vunpack.c.h.b16 %v873
    %v944 = vunpack.c.l.b16 %v874
    %v945 = vunpack.c.l.b16 %v875
    %v946 = vunpack.c.h.b16 %v874
    %v947 = vunpack.c.h.b16 %v875
    %v948 = vunpack.c.l.b16 %v876
    %v949 = vunpack.c.l.b16 %v877
    %v950 = vunpack.c.h.b16 %v876
    %v951 = vunpack.c.h.b16 %v877
    %v952 = vunpack.c.l.b16 %v878
    %v953 = vunpack.c.l.b16 %v879
    %v954 = vunpack.c.h.b16 %v878
    %v955 = vunpack.c.h.b16 %v879
    %v956 = vunpack.c.l.b16 %v880
    %v957 = vunpack.c.l.b16 %v881
    %v958 = vunpack.c.h.b16 %v880
    %v959 = vunpack.c.h.b16 %v881
    %v960 = vunpack.c.l.b16 %v882
    %v961 = vunpack.c.l.b16 %v883
    %v962 = vunpack.c.h.b16 %v882
    %v963 = vunpack.c.h.b16 %v883
    %v964 = vunpack.c.l.b16 %v884
    %v965 = vunpack.c.l.b16 %v885
    %v966 = vunpack.c.h.b16 %v884
    %v967 = vunpack.c.h.b16 %v885
    %v968 = vunpack.c.l.b16 %v886
    %v969 = vunpack.c.l.b16 %v887
    %v970 = vunpack.c.h.b16 %v886
    %v971 = vunpack.c.h.b16 %v887
    %v972 = vunpack.c.l.b16 %v888
    %v973 = vunpack.c.l.b16 %v889
    %v974 = vunpack.c.h.b16 %v888
    %v975 = vunpack.c.h.b16 %v889
    %v976 = vunpack.c.l.b16 %v890
    %v977 = vunpack.c.l.b16 %v891
    %v978 = vunpack.c.h.b16 %v890
    %v979 = vunpack.c.h.b16 %v891
    %v980 = vunpack.c.l.b16 %v892
    %v981 = vunpack.c.l.b16 %v893
    %v982 = vunpack.c.h.b16 %v892
    %v983 = vunpack.c.h.b16 %v893
    %v984 = vunpack.c.l.b16 %v894
    %v985 = vunpack.c.l.b16 %v895
    %v986 = vunpack.c.h.b16 %v894
    %v987 = vunpack.c.h.b16 %v895
    %v988 = vunpack.c.l.b16 %v896
    %v989 = vunpack.c.l.b16 %v897
    %v990 = vunpack.c.h.b16 %v896
    %v991 = vunpack.c.h.b16 %v897
    %v992 = vunpack.c.l.b16 %v898
    %v993 = vunpack.c.l.b16 %v899
    %v994 = vunpack.c.h.b16 %v898
    %v995 = vunpack.c.h.b16 %v899
    %v996 = vpack.c.b16 %v933, %v932
    %v997 = vpack.c.b16 %v935, %v934
    %v998 = vpack.c.b16 %v937, %v936
    %v999 = vpack.c.b16 %v939, %v938
    %v1000 = vpack.c.b16 %v941, %v940
    %v1001 = vpack.c.b16 %v943, %v942
    %v1002 = vpack.c.b16 %v945, %v944
    %v1003 = vpack.c.b16 %v947, %v946
    %v1004 = vpack.c.b16 %v949, %v948
    %v1005 = vpack.c.b16 %v951, %v950
    %v1006 = vpack.c.b16 %v953, %v952
    %v1007 = vpack.c.b16 %v955, %v954
    %v1008 = vpack.c.b16 %v957, %v956
    %v1009 = vpack.c.b16 %v959, %v958
    %v1010 = vpack.c.b16 %v961, %v960
    %v1011 = vpack.c.b16 %v963, %v962
    %v1012 = vpack.c.b16 %v965, %v964
    %v1013 = vpack.c.b16 %v967, %v966
    %v1014 = vpack.c.b16 %v969, %v968
    %v1015 = vpack.c.b16 %v971, %v970
    %v1016 = vpack.c.b16 %v973, %v972
    %v1017 = vpack.c.b16 %v975, %v974
    %v1018 = vpack.c.b16 %v977, %v976
    %v1019 = vpack.c.b16 %v979, %v978
    %v1020 = vpack.c.b16 %v981, %v980
    %v1021 = vpack.c.b16 %v983, %v982
    %v1022 = vpack.c.b16 %v985, %v984
    %v1023 = vpack.c.b16 %v987, %v986
    %v1024 = vpack.c.b16 %v989, %v988
    %v1025 = vpack.c.b16 %v991, %v990
    %v1026 = vpack.c.b16 %v993, %v992
    %v1027 = vpack.c.b16 %v995, %v994
    %1060 = vst [vmem:[#allocation7] sm:$0xff] %v996
    %1061 = vst [vmem:[#allocation7 + $0x8] sm:$0xff] %v997
    %1062 = vst [vmem:[#allocation7 + $0x10] sm:$0xff] %v998
    %1063 = vst [vmem:[#allocation7 + $0x18] sm:$0xff] %v999
    %1064 = vst [vmem:[#allocation7 + $0x20] sm:$0xff] %v1000
    %1065 = vst [vmem:[#allocation7 + $0x28] sm:$0xff] %v1001
    %1066 = vst [vmem:[#allocation7 + $0x30] sm:$0xff] %v1002
    %1067 = vst [vmem:[#allocation7 + $0x38] sm:$0xff] %v1003
    %1068 = vst [vmem:[#allocation7 + $0x40] sm:$0xff] %v1004
    %1069 = vst [vmem:[#allocation7 + $0x48] sm:$0xff] %v1005
    %1070 = vst [vmem:[#allocation7 + $0x50] sm:$0xff] %v1006
    %1071 = vst [vmem:[#allocation7 + $0x58] sm:$0xff] %v1007
    %1072 = vst [vmem:[#allocation7 + $0x60] sm:$0xff] %v1008
    %1073 = vst [vmem:[#allocation7 + $0x68] sm:$0xff] %v1009
    %1074 = vst [vmem:[#allocation7 + $0x70] sm:$0xff] %v1010
    %1075 = vst [vmem:[#allocation7 + $0x78] sm:$0xff] %v1011
    %1076 = vst [vmem:[#allocation7 + $0x80] sm:$0xff] %v1012
    %1077 = vst [vmem:[#allocation7 + $0x88] sm:$0xff] %v1013
    %1078 = vst [vmem:[#allocation7 + $0x90] sm:$0xff] %v1014
    %1079 = vst [vmem:[#allocation7 + $0x98] sm:$0xff] %v1015
    %1080 = vst [vmem:[#allocation7 + $0xa0] sm:$0xff] %v1016
    %1081 = vst [vmem:[#allocation7 + $0xa8] sm:$0xff] %v1017
    %1082 = vst [vmem:[#allocation7 + $0xb0] sm:$0xff] %v1018
    %1083 = vst [vmem:[#allocation7 + $0xb8] sm:$0xff] %v1019
    %1084 = vst [vmem:[#allocation7 + $0xc0] sm:$0xff] %v1020
    %1085 = vst [vmem:[#allocation7 + $0xc8] sm:$0xff] %v1021
    %1086 = vst [vmem:[#allocation7 + $0xd0] sm:$0xff] %v1022
    %1087 = vst [vmem:[#allocation7 + $0xd8] sm:$0xff] %v1023
    %1088 = vst [vmem:[#allocation7 + $0xe0] sm:$0xff] %v1024
    %1089 = vst [vmem:[#allocation7 + $0xe8] sm:$0xff] %v1025
    %1090 = vst [vmem:[#allocation7 + $0xf0] sm:$0xff] %v1026
    %1091 = vst [vmem:[#allocation7 + $0xf8] sm:$0xff] %v1027
    %s1092 = sld [smem:[#allocation3 + $0x80]]
    %v1093 = vstv %s1092
    %v1094 = vmul.f32 %v1093, %v156
    %v1095 = vmul.f32 %v1093, %v157
    %v1096 = vmul.f32 %v1093, %v158
    %v1097 = vmul.f32 %v1093, %v159
    %v1098 = vmul.f32 %v1093, %v160
    %v1099 = vmul.f32 %v1093, %v161
    %v1100 = vmul.f32 %v1093, %v162
    %v1101 = vmul.f32 %v1093, %v163
    %v1102 = vmul.f32 %v1093, %v164
    %v1103 = vmul.f32 %v1093, %v165
    %v1104 = vmul.f32 %v1093, %v166
    %v1105 = vmul.f32 %v1093, %v167
    %v1106 = vmul.f32 %v1093, %v168
    %v1107 = vmul.f32 %v1093, %v169
    %v1108 = vmul.f32 %v1093, %v170
    %v1109 = vmul.f32 %v1093, %v171
    %v1110 = vmul.f32 %v1093, %v172
    %v1111 = vmul.f32 %v1093, %v173
    %v1112 = vmul.f32 %v1093, %v174
    %v1113 = vmul.f32 %v1093, %v175
    %v1114 = vmul.f32 %v1093, %v176
    %v1115 = vmul.f32 %v1093, %v177
    %v1116 = vmul.f32 %v1093, %v178
    %v1117 = vmul.f32 %v1093, %v179
    %v1118 = vmul.f32 %v1093, %v180
    %v1119 = vmul.f32 %v1093, %v181
    %v1120 = vmul.f32 %v1093, %v182
    %v1121 = vmul.f32 %v1093, %v183
    %v1122 = vmul.f32 %v1093, %v184
    %v1123 = vmul.f32 %v1093, %v185
    %v1124 = vmul.f32 %v1093, %v186
    %v1125 = vmul.f32 %v1093, %v187
    %v1126 = vmul.f32 %v1093, %v188
    %v1127 = vmul.f32 %v1093, %v189
    %v1128 = vmul.f32 %v1093, %v190
    %v1129 = vmul.f32 %v1093, %v191
    %v1130 = vmul.f32 %v1093, %v192
    %v1131 = vmul.f32 %v1093, %v193
    %v1132 = vmul.f32 %v1093, %v194
    %v1133 = vmul.f32 %v1093, %v195
    %v1134 = vmul.f32 %v1093, %v196
    %v1135 = vmul.f32 %v1093, %v197
    %v1136 = vmul.f32 %v1093, %v198
    %v1137 = vmul.f32 %v1093, %v199
    %v1138 = vmul.f32 %v1093, %v200
    %v1139 = vmul.f32 %v1093, %v201
    %v1140 = vmul.f32 %v1093, %v202
    %v1141 = vmul.f32 %v1093, %v203
    %v1142 = vmul.f32 %v1093, %v204
    %v1143 = vmul.f32 %v1093, %v205
    %v1144 = vmul.f32 %v1093, %v206
    %v1145 = vmul.f32 %v1093, %v207
    %v1146 = vmul.f32 %v1093, %v208
    %v1147 = vmul.f32 %v1093, %v209
    %v1148 = vmul.f32 %v1093, %v210
    %v1149 = vmul.f32 %v1093, %v211
    %v1150 = vmul.f32 %v1093, %v212
    %v1151 = vmul.f32 %v1093, %v213
    %v1152 = vmul.f32 %v1093, %v214
    %v1153 = vmul.f32 %v1093, %v215
    %v1154 = vmul.f32 %v1093, %v216
    %v1155 = vmul.f32 %v1093, %v217
    %v1156 = vmul.f32 %v1093, %v218
    %v1157 = vmul.f32 %v1093, %v219
    %s1158 = sld [smem:[#allocation3 + $0x81]]
    %v1159 = vstv %s1158
    %v1160 = vmul.f32 %v1159, %v220
    %v1161 = vmul.f32 %v1159, %v221
    %v1162 = vmul.f32 %v1159, %v222
    %v1163 = vmul.f32 %v1159, %v223
    %v1164 = vmul.f32 %v1159, %v224
    %v1165 = vmul.f32 %v1159, %v225
    %v1166 = vmul.f32 %v1159, %v226
    %v1167 = vmul.f32 %v1159, %v227
    %v1168 = vmul.f32 %v1159, %v228
    %v1169 = vmul.f32 %v1159, %v229
    %v1170 = vmul.f32 %v1159, %v230
    %v1171 = vmul.f32 %v1159, %v231
    %v1172 = vmul.f32 %v1159, %v232
    %v1173 = vmul.f32 %v1159, %v233
    %v1174 = vmul.f32 %v1159, %v234
    %v1175 = vmul.f32 %v1159, %v235
    %v1176 = vmul.f32 %v1159, %v236
    %v1177 = vmul.f32 %v1159, %v237
    %v1178 = vmul.f32 %v1159, %v238
    %v1179 = vmul.f32 %v1159, %v239
    %v1180 = vmul.f32 %v1159, %v240
    %v1181 = vmul.f32 %v1159, %v241
    %v1182 = vmul.f32 %v1159, %v242
    %v1183 = vmul.f32 %v1159, %v243
    %v1184 = vmul.f32 %v1159, %v244
    %v1185 = vmul.f32 %v1159, %v245
    %v1186 = vmul.f32 %v1159, %v246
    %v1187 = vmul.f32 %v1159, %v247
    %v1188 = vmul.f32 %v1159, %v248
    %v1189 = vmul.f32 %v1159, %v249
    %v1190 = vmul.f32 %v1159, %v250
    %v1191 = vmul.f32 %v1159, %v251
    %v1192 = vmul.f32 %v1159, %v252
    %v1193 = vmul.f32 %v1159, %v253
    %v1194 = vmul.f32 %v1159, %v254
    %v1195 = vmul.f32 %v1159, %v255
    %v1196 = vmul.f32 %v1159, %v256
    %v1197 = vmul.f32 %v1159, %v257
    %v1198 = vmul.f32 %v1159, %v258
    %v1199 = vmul.f32 %v1159, %v259
    %v1200 = vmul.f32 %v1159, %v260
    %v1201 = vmul.f32 %v1159, %v261
    %v1202 = vmul.f32 %v1159, %v262
    %v1203 = vmul.f32 %v1159, %v263
    %v1204 = vmul.f32 %v1159, %v264
    %v1205 = vmul.f32 %v1159, %v265
    %v1206 = vmul.f32 %v1159, %v266
    %v1207 = vmul.f32 %v1159, %v267
    %v1208 = vmul.f32 %v1159, %v268
    %v1209 = vmul.f32 %v1159, %v269
    %v1210 = vmul.f32 %v1159, %v270
    %v1211 = vmul.f32 %v1159, %v271
    %v1212 = vmul.f32 %v1159, %v272
    %v1213 = vmul.f32 %v1159, %v273
    %v1214 = vmul.f32 %v1159, %v274
    %v1215 = vmul.f32 %v1159, %v275
    %v1216 = vmul.f32 %v1159, %v276
    %v1217 = vmul.f32 %v1159, %v277
    %v1218 = vmul.f32 %v1159, %v278
    %v1219 = vmul.f32 %v1159, %v279
    %v1220 = vmul.f32 %v1159, %v280
    %v1221 = vmul.f32 %v1159, %v281
    %v1222 = vmul.f32 %v1159, %v282
    %v1223 = vmul.f32 %v1159, %v283
    %v1224 = vadd.f32 %v1094, %v1160
    %v1225 = vadd.f32 %v1095, %v1161
    %v1226 = vadd.f32 %v1096, %v1162
    %v1227 = vadd.f32 %v1097, %v1163
    %v1228 = vadd.f32 %v1098, %v1164
    %v1229 = vadd.f32 %v1099, %v1165
    %v1230 = vadd.f32 %v1100, %v1166
    %v1231 = vadd.f32 %v1101, %v1167
    %v1232 = vadd.f32 %v1102, %v1168
    %v1233 = vadd.f32 %v1103, %v1169
    %v1234 = vadd.f32 %v1104, %v1170
    %v1235 = vadd.f32 %v1105, %v1171
    %v1236 = vadd.f32 %v1106, %v1172
    %v1237 = vadd.f32 %v1107, %v1173
    %v1238 = vadd.f32 %v1108, %v1174
    %v1239 = vadd.f32 %v1109, %v1175
    %v1240 = vadd.f32 %v1110, %v1176
    %v1241 = vadd.f32 %v1111, %v1177
    %v1242 = vadd.f32 %v1112, %v1178
    %v1243 = vadd.f32 %v1113, %v1179
    %v1244 = vadd.f32 %v1114, %v1180
    %v1245 = vadd.f32 %v1115, %v1181
    %v1246 = vadd.f32 %v1116, %v1182
    %v1247 = vadd.f32 %v1117, %v1183
    %v1248 = vadd.f32 %v1118, %v1184
    %v1249 = vadd.f32 %v1119, %v1185
    %v1250 = vadd.f32 %v1120, %v1186
    %v1251 = vadd.f32 %v1121, %v1187
    %v1252 = vadd.f32 %v1122, %v1188
    %v1253 = vadd.f32 %v1123, %v1189
    %v1254 = vadd.f32 %v1124, %v1190
    %v1255 = vadd.f32 %v1125, %v1191
    %v1256 = vadd.f32 %v1126, %v1192
    %v1257 = vadd.f32 %v1127, %v1193
    %v1258 = vadd.f32 %v1128, %v1194
    %v1259 = vadd.f32 %v1129, %v1195
    %v1260 = vadd.f32 %v1130, %v1196
    %v1261 = vadd.f32 %v1131, %v1197
    %v1262 = vadd.f32 %v1132, %v1198
    %v1263 = vadd.f32 %v1133, %v1199
    %v1264 = vadd.f32 %v1134, %v1200
    %v1265 = vadd.f32 %v1135, %v1201
    %v1266 = vadd.f32 %v1136, %v1202
    %v1267 = vadd.f32 %v1137, %v1203
    %v1268 = vadd.f32 %v1138, %v1204
    %v1269 = vadd.f32 %v1139, %v1205
    %v1270 = vadd.f32 %v1140, %v1206
    %v1271 = vadd.f32 %v1141, %v1207
    %v1272 = vadd.f32 %v1142, %v1208
    %v1273 = vadd.f32 %v1143, %v1209
    %v1274 = vadd.f32 %v1144, %v1210
    %v1275 = vadd.f32 %v1145, %v1211
    %v1276 = vadd.f32 %v1146, %v1212
    %v1277 = vadd.f32 %v1147, %v1213
    %v1278 = vadd.f32 %v1148, %v1214
    %v1279 = vadd.f32 %v1149, %v1215
    %v1280 = vadd.f32 %v1150, %v1216
    %v1281 = vadd.f32 %v1151, %v1217
    %v1282 = vadd.f32 %v1152, %v1218
    %v1283 = vadd.f32 %v1153, %v1219
    %v1284 = vadd.f32 %v1154, %v1220
    %v1285 = vadd.f32 %v1155, %v1221
    %v1286 = vadd.f32 %v1156, %v1222
    %v1287 = vadd.f32 %v1157, %v1223
    %s1288 = sld [smem:[#allocation3 + $0x82]]
    %v1289 = vstv %s1288
    %v1290 = vmul.f32 %v1289, %v284
    %v1291 = vmul.f32 %v1289, %v285
    %v1292 = vmul.f32 %v1289, %v286
    %v1293 = vmul.f32 %v1289, %v287
    %v1294 = vmul.f32 %v1289, %v288
    %v1295 = vmul.f32 %v1289, %v289
    %v1296 = vmul.f32 %v1289, %v290
    %v1297 = vmul.f32 %v1289, %v291
    %v1298 = vmul.f32 %v1289, %v292
    %v1299 = vmul.f32 %v1289, %v293
    %v1300 = vmul.f32 %v1289, %v294
    %v1301 = vmul.f32 %v1289, %v295
    %v1302 = vmul.f32 %v1289, %v296
    %v1303 = vmul.f32 %v1289, %v297
    %v1304 = vmul.f32 %v1289, %v298
    %v1305 = vmul.f32 %v1289, %v299
    %v1306 = vmul.f32 %v1289, %v300
    %v1307 = vmul.f32 %v1289, %v301
    %v1308 = vmul.f32 %v1289, %v302
    %v1309 = vmul.f32 %v1289, %v303
    %v1310 = vmul.f32 %v1289, %v304
    %v1311 = vmul.f32 %v1289, %v305
    %v1312 = vmul.f32 %v1289, %v306
    %v1313 = vmul.f32 %v1289, %v307
    %v1314 = vmul.f32 %v1289, %v308
    %v1315 = vmul.f32 %v1289, %v309
    %v1316 = vmul.f32 %v1289, %v310
    %v1317 = vmul.f32 %v1289, %v311
    %v1318 = vmul.f32 %v1289, %v312
    %v1319 = vmul.f32 %v1289, %v313
    %v1320 = vmul.f32 %v1289, %v314
    %v1321 = vmul.f32 %v1289, %v315
    %v1322 = vmul.f32 %v1289, %v316
    %v1323 = vmul.f32 %v1289, %v317
    %v1324 = vmul.f32 %v1289, %v318
    %v1325 = vmul.f32 %v1289, %v319
    %v1326 = vmul.f32 %v1289, %v320
    %v1327 = vmul.f32 %v1289, %v321
    %v1328 = vmul.f32 %v1289, %v322
    %v1329 = vmul.f32 %v1289, %v323
    %v1330 = vmul.f32 %v1289, %v324
    %v1331 = vmul.f32 %v1289, %v325
    %v1332 = vmul.f32 %v1289, %v326
    %v1333 = vmul.f32 %v1289, %v327
    %v1334 = vmul.f32 %v1289, %v328
    %v1335 = vmul.f32 %v1289, %v329
    %v1336 = vmul.f32 %v1289, %v330
    %v1337 = vmul.f32 %v1289, %v331
    %v1338 = vmul.f32 %v1289, %v332
    %v1339 = vmul.f32 %v1289, %v333
    %v1340 = vmul.f32 %v1289, %v334
    %v1341 = vmul.f32 %v1289, %v335
    %v1342 = vmul.f32 %v1289, %v336
    %v1343 = vmul.f32 %v1289, %v337
    %v1344 = vmul.f32 %v1289, %v338
    %v1345 = vmul.f32 %v1289, %v339
    %v1346 = vmul.f32 %v1289, %v340
    %v1347 = vmul.f32 %v1289, %v341
    %v1348 = vmul.f32 %v1289, %v342
    %v1349 = vmul.f32 %v1289, %v343
    %v1350 = vmul.f32 %v1289, %v344
    %v1351 = vmul.f32 %v1289, %v345
    %v1352 = vmul.f32 %v1289, %v346
    %v1353 = vmul.f32 %v1289, %v347
    %v1354 = vadd.f32 %v1224, %v1290
    %v1355 = vadd.f32 %v1225, %v1291
    %v1356 = vadd.f32 %v1226, %v1292
    %v1357 = vadd.f32 %v1227, %v1293
    %v1358 = vadd.f32 %v1228, %v1294
    %v1359 = vadd.f32 %v1229, %v1295
    %v1360 = vadd.f32 %v1230, %v1296
    %v1361 = vadd.f32 %v1231, %v1297
    %v1362 = vadd.f32 %v1232, %v1298
    %v1363 = vadd.f32 %v1233, %v1299
    %v1364 = vadd.f32 %v1234, %v1300
    %v1365 = vadd.f32 %v1235, %v1301
    %v1366 = vadd.f32 %v1236, %v1302
    %v1367 = vadd.f32 %v1237, %v1303
    %v1368 = vadd.f32 %v1238, %v1304
    %v1369 = vadd.f32 %v1239, %v1305
    %v1370 = vadd.f32 %v1240, %v1306
    %v1371 = vadd.f32 %v1241, %v1307
    %v1372 = vadd.f32 %v1242, %v1308
    %v1373 = vadd.f32 %v1243, %v1309
    %v1374 = vadd.f32 %v1244, %v1310
    %v1375 = vadd.f32 %v1245, %v1311
    %v1376 = vadd.f32 %v1246, %v1312
    %v1377 = vadd.f32 %v1247, %v1313
    %v1378 = vadd.f32 %v1248, %v1314
    %v1379 = vadd.f32 %v1249, %v1315
    %v1380 = vadd.f32 %v1250, %v1316
    %v1381 = vadd.f32 %v1251, %v1317
    %v1382 = vadd.f32 %v1252, %v1318
    %v1383 = vadd.f32 %v1253, %v1319
    %v1384 = vadd.f32 %v1254, %v1320
    %v1385 = vadd.f32 %v1255, %v1321
    %v1386 = vadd.f32 %v1256, %v1322
    %v1387 = vadd.f32 %v1257, %v1323
    %v1388 = vadd.f32 %v1258, %v1324
    %v1389 = vadd.f32 %v1259, %v1325
    %v1390 = vadd.f32 %v1260, %v1326
    %v1391 = vadd.f32 %v1261, %v1327
    %v1392 = vadd.f32 %v1262, %v1328
    %v1393 = vadd.f32 %v1263, %v1329
    %v1394 = vadd.f32 %v1264, %v1330
    %v1395 = vadd.f32 %v1265, %v1331
    %v1396 = vadd.f32 %v1266, %v1332
    %v1397 = vadd.f32 %v1267, %v1333
    %v1398 = vadd.f32 %v1268, %v1334
    %v1399 = vadd.f32 %v1269, %v1335
    %v1400 = vadd.f32 %v1270, %v1336
    %v1401 = vadd.f32 %v1271, %v1337
    %v1402 = vadd.f32 %v1272, %v1338
    %v1403 = vadd.f32 %v1273, %v1339
    %v1404 = vadd.f32 %v1274, %v1340
    %v1405 = vadd.f32 %v1275, %v1341
    %v1406 = vadd.f32 %v1276, %v1342
    %v1407 = vadd.f32 %v1277, %v1343
    %v1408 = vadd.f32 %v1278, %v1344
    %v1409 = vadd.f32 %v1279, %v1345
    %v1410 = vadd.f32 %v1280, %v1346
    %v1411 = vadd.f32 %v1281, %v1347
    %v1412 = vadd.f32 %v1282, %v1348
    %v1413 = vadd.f32 %v1283, %v1349
    %v1414 = vadd.f32 %v1284, %v1350
    %v1415 = vadd.f32 %v1285, %v1351
    %v1416 = vadd.f32 %v1286, %v1352
    %v1417 = vadd.f32 %v1287, %v1353
    %s1418 = sld [smem:[#allocation3 + $0x83]]
    %v1419 = vstv %s1418
    %v1420 = vmul.f32 %v1419, %v348
    %v1421 = vmul.f32 %v1419, %v349
    %v1422 = vmul.f32 %v1419, %v350
    %v1423 = vmul.f32 %v1419, %v351
    %v1424 = vmul.f32 %v1419, %v352
    %v1425 = vmul.f32 %v1419, %v353
    %v1426 = vmul.f32 %v1419, %v354
    %v1427 = vmul.f32 %v1419, %v355
    %v1428 = vmul.f32 %v1419, %v356
    %v1429 = vmul.f32 %v1419, %v357
    %v1430 = vmul.f32 %v1419, %v358
    %v1431 = vmul.f32 %v1419, %v359
    %v1432 = vmul.f32 %v1419, %v360
    %v1433 = vmul.f32 %v1419, %v361
    %v1434 = vmul.f32 %v1419, %v362
    %v1435 = vmul.f32 %v1419, %v363
    %v1436 = vmul.f32 %v1419, %v364
    %v1437 = vmul.f32 %v1419, %v365
    %v1438 = vmul.f32 %v1419, %v366
    %v1439 = vmul.f32 %v1419, %v367
    %v1440 = vmul.f32 %v1419, %v368
    %v1441 = vmul.f32 %v1419, %v369
    %v1442 = vmul.f32 %v1419, %v370
    %v1443 = vmul.f32 %v1419, %v371
    %v1444 = vmul.f32 %v1419, %v372
    %v1445 = vmul.f32 %v1419, %v373
    %v1446 = vmul.f32 %v1419, %v374
    %v1447 = vmul.f32 %v1419, %v375
    %v1448 = vmul.f32 %v1419, %v376
    %v1449 = vmul.f32 %v1419, %v377
    %v1450 = vmul.f32 %v1419, %v378
    %v1451 = vmul.f32 %v1419, %v379
    %v1452 = vmul.f32 %v1419, %v380
    %v1453 = vmul.f32 %v1419, %v381
    %v1454 = vmul.f32 %v1419, %v382
    %v1455 = vmul.f32 %v1419, %v383
    %v1456 = vmul.f32 %v1419, %v384
    %v1457 = vmul.f32 %v1419, %v385
    %v1458 = vmul.f32 %v1419, %v386
    %v1459 = vmul.f32 %v1419, %v387
    %v1460 = vmul.f32 %v1419, %v388
    %v1461 = vmul.f32 %v1419, %v389
    %v1462 = vmul.f32 %v1419, %v390
    %v1463 = vmul.f32 %v1419, %v391
    %v1464 = vmul.f32 %v1419, %v392
    %v1465 = vmul.f32 %v1419, %v393
    %v1466 = vmul.f32 %v1419, %v394
    %v1467 = vmul.f32 %v1419, %v395
    %v1468 = vmul.f32 %v1419, %v396
    %v1469 = vmul.f32 %v1419, %v397
    %v1470 = vmul.f32 %v1419, %v398
    %v1471 = vmul.f32 %v1419, %v399
    %v1472 = vmul.f32 %v1419, %v400
    %v1473 = vmul.f32 %v1419, %v401
    %v1474 = vmul.f32 %v1419, %v402
    %v1475 = vmul.f32 %v1419, %v403
    %v1476 = vmul.f32 %v1419, %v404
    %v1477 = vmul.f32 %v1419, %v405
    %v1478 = vmul.f32 %v1419, %v406
    %v1479 = vmul.f32 %v1419, %v407
    %v1480 = vmul.f32 %v1419, %v408
    %v1481 = vmul.f32 %v1419, %v409
    %v1482 = vmul.f32 %v1419, %v410
    %v1483 = vmul.f32 %v1419, %v411
    %v1484 = vadd.f32 %v1354, %v1420
    %v1485 = vadd.f32 %v1355, %v1421
    %v1486 = vadd.f32 %v1356, %v1422
    %v1487 = vadd.f32 %v1357, %v1423
    %v1488 = vadd.f32 %v1358, %v1424
    %v1489 = vadd.f32 %v1359, %v1425
    %v1490 = vadd.f32 %v1360, %v1426
    %v1491 = vadd.f32 %v1361, %v1427
    %v1492 = vadd.f32 %v1362, %v1428
    %v1493 = vadd.f32 %v1363, %v1429
    %v1494 = vadd.f32 %v1364, %v1430
    %v1495 = vadd.f32 %v1365, %v1431
    %v1496 = vadd.f32 %v1366, %v1432
    %v1497 = vadd.f32 %v1367, %v1433
    %v1498 = vadd.f32 %v1368, %v1434
    %v1499 = vadd.f32 %v1369, %v1435
    %v1500 = vadd.f32 %v1370, %v1436
    %v1501 = vadd.f32 %v1371, %v1437
    %v1502 = vadd.f32 %v1372, %v1438
    %v1503 = vadd.f32 %v1373, %v1439
    %v1504 = vadd.f32 %v1374, %v1440
    %v1505 = vadd.f32 %v1375, %v1441
    %v1506 = vadd.f32 %v1376, %v1442
    %v1507 = vadd.f32 %v1377, %v1443
    %v1508 = vadd.f32 %v1378, %v1444
    %v1509 = vadd.f32 %v1379, %v1445
    %v1510 = vadd.f32 %v1380, %v1446
    %v1511 = vadd.f32 %v1381, %v1447
    %v1512 = vadd.f32 %v1382, %v1448
    %v1513 = vadd.f32 %v1383, %v1449
    %v1514 = vadd.f32 %v1384, %v1450
    %v1515 = vadd.f32 %v1385, %v1451
    %v1516 = vadd.f32 %v1386, %v1452
    %v1517 = vadd.f32 %v1387, %v1453
    %v1518 = vadd.f32 %v1388, %v1454
    %v1519 = vadd.f32 %v1389, %v1455
    %v1520 = vadd.f32 %v1390, %v1456
    %v1521 = vadd.f32 %v1391, %v1457
    %v1522 = vadd.f32 %v1392, %v1458
    %v1523 = vadd.f32 %v1393, %v1459
    %v1524 = vadd.f32 %v1394, %v1460
    %v1525 = vadd.f32 %v1395, %v1461
    %v1526 = vadd.f32 %v1396, %v1462
    %v1527 = vadd.f32 %v1397, %v1463
    %v1528 = vadd.f32 %v1398, %v1464
    %v1529 = vadd.f32 %v1399, %v1465
    %v1530 = vadd.f32 %v1400, %v1466
    %v1531 = vadd.f32 %v1401, %v1467
    %v1532 = vadd.f32 %v1402, %v1468
    %v1533 = vadd.f32 %v1403, %v1469
    %v1534 = vadd.f32 %v1404, %v1470
    %v1535 = vadd.f32 %v1405, %v1471
    %v1536 = vadd.f32 %v1406, %v1472
    %v1537 = vadd.f32 %v1407, %v1473
    %v1538 = vadd.f32 %v1408, %v1474
    %v1539 = vadd.f32 %v1409, %v1475
    %v1540 = vadd.f32 %v1410, %v1476
    %v1541 = vadd.f32 %v1411, %v1477
    %v1542 = vadd.f32 %v1412, %v1478
    %v1543 = vadd.f32 %v1413, %v1479
    %v1544 = vadd.f32 %v1414, %v1480
    %v1545 = vadd.f32 %v1415, %v1481
    %v1546 = vadd.f32 %v1416, %v1482
    %v1547 = vadd.f32 %v1417, %v1483
    %v1548 = vpack.c.bf16 %v1486, %v1484
    %v1549 = vpack.c.bf16 %v1487, %v1485
    %v1550 = vpack.c.bf16 %v1490, %v1488
    %v1551 = vpack.c.bf16 %v1491, %v1489
    %v1552 = vpack.c.bf16 %v1494, %v1492
    %v1553 = vpack.c.bf16 %v1495, %v1493
    %v1554 = vpack.c.bf16 %v1498, %v1496
    %v1555 = vpack.c.bf16 %v1499, %v1497
    %v1556 = vpack.c.bf16 %v1502, %v1500
    %v1557 = vpack.c.bf16 %v1503, %v1501
    %v1558 = vpack.c.bf16 %v1506, %v1504
    %v1559 = vpack.c.bf16 %v1507, %v1505
    %v1560 = vpack.c.bf16 %v1510, %v1508
    %v1561 = vpack.c.bf16 %v1511, %v1509
    %v1562 = vpack.c.bf16 %v1514, %v1512
    %v1563 = vpack.c.bf16 %v1515, %v1513
    %v1564 = vpack.c.bf16 %v1518, %v1516
    %v1565 = vpack.c.bf16 %v1519, %v1517
    %v1566 = vpack.c.bf16 %v1522, %v1520
    %v1567 = vpack.c.bf16 %v1523, %v1521
    %v1568 = vpack.c.bf16 %v1526, %v1524
    %v1569 = vpack.c.bf16 %v1527, %v1525
    %v1570 = vpack.c.bf16 %v1530, %v1528
    %v1571 = vpack.c.bf16 %v1531, %v1529
    %v1572 = vpack.c.bf16 %v1534, %v1532
    %v1573 = vpack.c.bf16 %v1535, %v1533
    %v1574 = vpack.c.bf16 %v1538, %v1536
    %v1575 = vpack.c.bf16 %v1539, %v1537
    %v1576 = vpack.c.bf16 %v1542, %v1540
    %v1577 = vpack.c.bf16 %v1543, %v1541
    %v1578 = vpack.c.bf16 %v1546, %v1544
    %v1579 = vpack.c.bf16 %v1547, %v1545
    %v1612 = vunpack.c.l.b16 %v1548
    %v1613 = vunpack.c.l.b16 %v1549
    %v1614 = vunpack.c.h.b16 %v1548
    %v1615 = vunpack.c.h.b16 %v1549
    %v1616 = vunpack.c.l.b16 %v1550
    %v1617 = vunpack.c.l.b16 %v1551
    %v1618 = vunpack.c.h.b16 %v1550
    %v1619 = vunpack.c.h.b16 %v1551
    %v1620 = vunpack.c.l.b16 %v1552
    %v1621 = vunpack.c.l.b16 %v1553
    %v1622 = vunpack.c.h.b16 %v1552
    %v1623 = vunpack.c.h.b16 %v1553
    %v1624 = vunpack.c.l.b16 %v1554
    %v1625 = vunpack.c.l.b16 %v1555
    %v1626 = vunpack.c.h.b16 %v1554
    %v1627 = vunpack.c.h.b16 %v1555
    %v1628 = vunpack.c.l.b16 %v1556
    %v1629 = vunpack.c.l.b16 %v1557
    %v1630 = vunpack.c.h.b16 %v1556
    %v1631 = vunpack.c.h.b16 %v1557
    %v1632 = vunpack.c.l.b16 %v1558
    %v1633 = vunpack.c.l.b16 %v1559
    %v1634 = vunpack.c.h.b16 %v1558
    %v1635 = vunpack.c.h.b16 %v1559
    %v1636 = vunpack.c.l.b16 %v1560
    %v1637 = vunpack.c.l.b16 %v1561
    %v1638 = vunpack.c.h.b16 %v1560
    %v1639 = vunpack.c.h.b16 %v1561
    %v1640 = vunpack.c.l.b16 %v1562
    %v1641 = vunpack.c.l.b16 %v1563
    %v1642 = vunpack.c.h.b16 %v1562
    %v1643 = vunpack.c.h.b16 %v1563
    %v1644 = vunpack.c.l.b16 %v1564
    %v1645 = vunpack.c.l.b16 %v1565
    %v1646 = vunpack.c.h.b16 %v1564
    %v1647 = vunpack.c.h.b16 %v1565
    %v1648 = vunpack.c.l.b16 %v1566
    %v1649 = vunpack.c.l.b16 %v1567
    %v1650 = vunpack.c.h.b16 %v1566
    %v1651 = vunpack.c.h.b16 %v1567
    %v1652 = vunpack.c.l.b16 %v1568
    %v1653 = vunpack.c.l.b16 %v1569
    %v1654 = vunpack.c.h.b16 %v1568
    %v1655 = vunpack.c.h.b16 %v1569
    %v1656 = vunpack.c.l.b16 %v1570
    %v1657 = vunpack.c.l.b16 %v1571
    %v1658 = vunpack.c.h.b16 %v1570
    %v1659 = vunpack.c.h.b16 %v1571
    %v1660 = vunpack.c.l.b16 %v1572
    %v1661 = vunpack.c.l.b16 %v1573
    %v1662 = vunpack.c.h.b16 %v1572
    %v1663 = vunpack.c.h.b16 %v1573
    %v1664 = vunpack.c.l.b16 %v1574
    %v1665 = vunpack.c.l.b16 %v1575
    %v1666 = vunpack.c.h.b16 %v1574
    %v1667 = vunpack.c.h.b16 %v1575
    %v1668 = vunpack.c.l.b16 %v1576
    %v1669 = vunpack.c.l.b16 %v1577
    %v1670 = vunpack.c.h.b16 %v1576
    %v1671 = vunpack.c.h.b16 %v1577
    %v1672 = vunpack.c.l.b16 %v1578
    %v1673 = vunpack.c.l.b16 %v1579
    %v1674 = vunpack.c.h.b16 %v1578
    %v1675 = vunpack.c.h.b16 %v1579
    %v1676 = vpack.c.b16 %v1613, %v1612
    %v1677 = vpack.c.b16 %v1615, %v1614
    %v1678 = vpack.c.b16 %v1617, %v1616
    %v1679 = vpack.c.b16 %v1619, %v1618
    %v1680 = vpack.c.b16 %v1621, %v1620
    %v1681 = vpack.c.b16 %v1623, %v1622
    %v1682 = vpack.c.b16 %v1625, %v1624
    %v1683 = vpack.c.b16 %v1627, %v1626
    %v1684 = vpack.c.b16 %v1629, %v1628
    %v1685 = vpack.c.b16 %v1631, %v1630
    %v1686 = vpack.c.b16 %v1633, %v1632
    %v1687 = vpack.c.b16 %v1635, %v1634
    %v1688 = vpack.c.b16 %v1637, %v1636
    %v1689 = vpack.c.b16 %v1639, %v1638
    %v1690 = vpack.c.b16 %v1641, %v1640
    %v1691 = vpack.c.b16 %v1643, %v1642
    %v1692 = vpack.c.b16 %v1645, %v1644
    %v1693 = vpack.c.b16 %v1647, %v1646
    %v1694 = vpack.c.b16 %v1649, %v1648
    %v1695 = vpack.c.b16 %v1651, %v1650
    %v1696 = vpack.c.b16 %v1653, %v1652
    %v1697 = vpack.c.b16 %v1655, %v1654
    %v1698 = vpack.c.b16 %v1657, %v1656
    %v1699 = vpack.c.b16 %v1659, %v1658
    %v1700 = vpack.c.b16 %v1661, %v1660
    %v1701 = vpack.c.b16 %v1663, %v1662
    %v1702 = vpack.c.b16 %v1665, %v1664
    %v1703 = vpack.c.b16 %v1667, %v1666
    %v1704 = vpack.c.b16 %v1669, %v1668
    %v1705 = vpack.c.b16 %v1671, %v1670
    %v1706 = vpack.c.b16 %v1673, %v1672
    %v1707 = vpack.c.b16 %v1675, %v1674
    %s1740 = scalar_lea.vmem [#allocation7], 256
    %1741 = vst [vmem:[%s1740] sm:$0xff] %v1676
    %1742 = vst [vmem:[%s1740 + $0x8] sm:$0xff] %v1677
    %1743 = vst [vmem:[%s1740 + $0x10] sm:$0xff] %v1678
    %1744 = vst [vmem:[%s1740 + $0x18] sm:$0xff] %v1679
    %1745 = vst [vmem:[%s1740 + $0x20] sm:$0xff] %v1680
    %1746 = vst [vmem:[%s1740 + $0x28] sm:$0xff] %v1681
    %1747 = vst [vmem:[%s1740 + $0x30] sm:$0xff] %v1682
    %1748 = vst [vmem:[%s1740 + $0x38] sm:$0xff] %v1683
    %1749 = vst [vmem:[%s1740 + $0x40] sm:$0xff] %v1684
    %1750 = vst [vmem:[%s1740 + $0x48] sm:$0xff] %v1685
    %1751 = vst [vmem:[%s1740 + $0x50] sm:$0xff] %v1686
    %1752 = vst [vmem:[%s1740 + $0x58] sm:$0xff] %v1687
    %1753 = vst [vmem:[%s1740 + $0x60] sm:$0xff] %v1688
    %1754 = vst [vmem:[%s1740 + $0x68] sm:$0xff] %v1689
    %1755 = vst [vmem:[%s1740 + $0x70] sm:$0xff] %v1690
    %1756 = vst [vmem:[%s1740 + $0x78] sm:$0xff] %v1691
    %1757 = vst [vmem:[%s1740 + $0x80] sm:$0xff] %v1692
    %1758 = vst [vmem:[%s1740 + $0x88] sm:$0xff] %v1693
    %1759 = vst [vmem:[%s1740 + $0x90] sm:$0xff] %v1694
    %1760 = vst [vmem:[%s1740 + $0x98] sm:$0xff] %v1695
    %1761 = vst [vmem:[%s1740 + $0xa0] sm:$0xff] %v1696
    %1762 = vst [vmem:[%s1740 + $0xa8] sm:$0xff] %v1697
    %1763 = vst [vmem:[%s1740 + $0xb0] sm:$0xff] %v1698
    %1764 = vst [vmem:[%s1740 + $0xb8] sm:$0xff] %v1699
    %1765 = vst [vmem:[%s1740 + $0xc0] sm:$0xff] %v1700
    %1766 = vst [vmem:[%s1740 + $0xc8] sm:$0xff] %v1701
    %1767 = vst [vmem:[%s1740 + $0xd0] sm:$0xff] %v1702
    %1768 = vst [vmem:[%s1740 + $0xd8] sm:$0xff] %v1703
    %1769 = vst [vmem:[%s1740 + $0xe0] sm:$0xff] %v1704
    %1770 = vst [vmem:[%s1740 + $0xe8] sm:$0xff] %v1705
    %1771 = vst [vmem:[%s1740 + $0xf0] sm:$0xff] %v1706
    %1772 = vst [vmem:[%s1740 + $0xf8] sm:$0xff] %v1707
    // Predicated region
    $region10: #{tpu_custom_call.1} parent=1 // pred_check
      _
    $region11: #{tpu_custom_call.1} parent=1 // pred_check_branch
      %1774 = sbr.rel (0) target = $region13
    $region12: #{tpu_custom_call.1} parent=1 // pred_region
      %s1776 = ssub.s32 8192, 8192
      %1777 = vsyncadd [#allocation6], %s1776
      %s1778 = sshll.u32 [#allocation7], 4
      %s1779 = int_to_ptr.vmem [resolvable:$true] %s1778
      %1784 = dma.vmem_to_hbm [thread:$0]  %s1779, 8192, %s2, [#allocation6], 128, 128, 8
    $region13: #{tpu_custom_call.1} parent=1 // pred_fallthru
      _
    // Predicated region
    $region14: #{tpu_custom_call.1} parent=1 // pred_check
      _
    $region15: #{tpu_custom_call.1} parent=1 // pred_check_branch
      %1786 = sbr.rel (0) target = $region17
    $region16: #{tpu_custom_call.1} parent=1 // pred_region
      %1787 = dma.done [#allocation6], 8192
    $region17: #{tpu_custom_call.1} parent=1 // pred_fallthru
      _
    %1788 = vsyncpa [#allocation5], 1
    %1789 = vsyncpa [#allocation6], 1

</llo_original>
